<compile_context>
chip_gen: v6e
topology: v6e:2x2x1
jax: 0.10.0
libtpu: 0.0.40
codegen_flags: <defaults>
</compile_context>

<pallas_src>
import functools
import math

import jax
import jax.numpy as jnp
from jax.experimental import pallas as pl
from jax.experimental.pallas import tpu as pltpu

EPS = 1e-5
LANE = 128
SUBLANE = 8


def _round_up(x, m):
    return (x + m - 1) // m * m


# --------------------------- fused per-layer kernel (grid over layers) ---------------------------
def uisnet_layer_kernel(x_ref, w_ref, b_ref, g_ref, bt_ref, m_ref, vcol_ref,
                        out_ref, act_ref, xcol_ref, *, W, C, P_real, P_pad):
    """One grid step == one Conv2d(3x3, pad=1) + ReLU + BatchNorm2d layer.

    x_ref   : (C, P_pad)    network input (read once at layer 0); channels on sublanes,
                            P = N*H*W pixels (padded to a 128 multiple) on lanes
    w_ref   : (C, 9*C)      this layer's weights, w[cout, tap*C + cin] (1x1 conv embedded)
    b_ref   : (C, 1)        conv bias   (0 on padded channels)
    g_ref   : (C, 1)        BN gamma    (0 on padded channels)
    bt_ref  : (C, 1)        BN beta     (0 on padded channels)
    m_ref   : (8, P_pad)    rows 0..3 = {hh>=1, hh<=H-2, ww>=1, ww<=W-2} border conditions
    vcol_ref: (P_pad, 1)    pixel-validity column (p < N*H*W); doubles as BN "ones" vector
    out_ref : (C, P_pad)    final activations (written at the last layer only)
    act_ref : (C, P_pad)    persistent activation scratch (VMEM, survives grid steps)
    xcol_ref: (9*C, P_pad)  im2col scratch (VMEM, reused every layer)
    """
    l = pl.program_id(0)
    inv_p = 1.0 / float(P_real)

    @pl.when(l == 0)
    def _():
        act_ref[...] = x_ref[...]

    act = act_ref[...]

    # Border masks as (1, P_pad) rows; broadcast over the C sublanes when applied.
    m_up, m_dn = m_ref[0:1, :], m_ref[1:2, :]
    m_lf, m_rt = m_ref[2:3, :], m_ref[3:4, :]
    row_mask = {-1: m_up, 0: None, 1: m_dn}
    col_mask = {-1: m_lf, 0: None, 1: m_rt}

    # im2col: 9 rolled + masked taps written tap-by-tap into the persistent scratch.
    # pltpu.roll rides the XLU slot; masking is a single broadcast VPU multiply per tap.
    t = 0
    for dy in range(3):
        for dx in range(3):
            oy, ox = dy - 1, dx - 1
            s = oy * W + ox                                   # flat-pixel shift of this tap
            tap = act if s == 0 else pltpu.roll(act, shift=(-s) % P_pad, axis=1)
            rm, cm = row_mask[oy], col_mask[ox]
            if rm is not None and cm is not None:
                tap = tap * (rm * cm)                         # corner tap: combined mask
            elif rm is not None:
                tap = tap * rm
            elif cm is not None:
                tap = tap * cm
            xcol_ref[t * C:(t + 1) * C, :] = tap
            t += 1

    # Conv as one deep MXU matmul (contraction 9*C); conv bias fused into the ReLU pass.
    acc = jnp.dot(w_ref[...], xcol_ref[...], preferred_element_type=jnp.float32)
    acc = jnp.maximum(acc + b_ref[...], 0.0)

    # BatchNorm2d, training-mode batch statistics (biased variance), two-pass moments.
    # The reductions run on the (otherwise idle) MXU as dot products with the validity
    # column, which also excludes padded pixel columns from the statistics.
    vcol = vcol_ref[...]
    mean = jnp.dot(acc, vcol, preferred_element_type=jnp.float32) * inv_p      # (C, 1)
    d = acc - mean
    var = jnp.dot(d * d, vcol, preferred_element_type=jnp.float32) * inv_p     # (C, 1)
    scale = g_ref[...] * jax.lax.rsqrt(var + EPS)
    new_act = d * scale + bt_ref[...]
    act_ref[...] = new_act
    # TODO(synk): BN running_mean/running_var updates (training-only side effect) are not
    # materialized; they do not affect the forward output.

    @pl.when(l == pl.num_programs(0) - 1)
    def _():
        out_ref[...] = new_act


# --------------------------------- host-side glue ---------------------------------
def _pack_params(params):
    """Stack per-layer params into channel-padded, 3x3-embedded tensors.

    params: list of (w (K*K, Cin, Cout), b (1, Cout), gamma (1, Cout), beta (1, Cout), K)
    """
    f = params[-1][0].shape[-1]                              # n_pixel_features
    cin_max = max(p[0].shape[1] for p in params)
    C = _round_up(max(cin_max, f), SUBLANE)
    w_all, b_all, g_all, bt_all = [], [], [], []
    for (w, b, gamma, beta, k) in params:
        _, cin, cout = w.shape
        off = (3 - k) // 2                                   # embed KxK at center of 3x3
        w33 = jnp.zeros((3, 3, C, C), jnp.float32)
        w33 = w33.at[off:off + k, off:off + k, :cin, :cout].set(
            w.reshape(k, k, cin, cout).astype(jnp.float32))
        # (dy, dx, cin, cout) -> (cout, tap*C + cin), tap = dy*3 + dx
        w2 = jnp.transpose(w33.reshape(9, C, C), (2, 0, 1)).reshape(C, 9 * C)
        w_all.append(w2)
        b_all.append(jnp.zeros((C,), jnp.float32).at[:cout].set(b.reshape(-1)))
        g_all.append(jnp.zeros((C,), jnp.float32).at[:cout].set(gamma.reshape(-1)))
        bt_all.append(jnp.zeros((C,), jnp.float32).at[:cout].set(beta.reshape(-1)))
    return (jnp.stack(w_all),
            jnp.stack(b_all)[:, :, None],
            jnp.stack(g_all)[:, :, None],
            jnp.stack(bt_all)[:, :, None],
            C, f)


def _make_masks(N, H, W, P, P_pad):
    """(8, P_pad) border-condition rows + (P_pad, 1) pixel-validity column (f32)."""
    p = jnp.arange(P_pad, dtype=jnp.int32)
    hh = (p // W) % H
    ww = p % W
    zeros = jnp.zeros((P_pad,), jnp.float32)
    rows = jnp.stack([
        (hh >= 1).astype(jnp.float32),        # neighbor at oy = -1 in bounds
        (hh <= H - 2).astype(jnp.float32),    # neighbor at oy = +1 in bounds
        (ww >= 1).astype(jnp.float32),        # neighbor at ox = -1 in bounds
        (ww <= W - 2).astype(jnp.float32),    # neighbor at ox = +1 in bounds
        zeros, zeros, zeros, zeros,           # sublane padding
    ])                                        # (8, P_pad)
    vcol = (p < P).astype(jnp.float32)[:, None]  # (P_pad, 1)
    return rows, vcol


def uisnet_forward(x_nchw, params):
    """Forward pass of UISNet. Input/output are NCHW like the PyTorch module."""
    w_all, b_all, g_all, bt_all, C, F = _pack_params(params)
    N, cin0, H, W = x_nchw.shape
    L = w_all.shape[0]
    P = N * H * W
    P_pad = _round_up(P, LANE)

    # NCHW -> lane-dense (C, P): channels on sublanes, pixels on the 128-lane axis.
    x = jnp.transpose(x_nchw.astype(jnp.float32), (1, 0, 2, 3)).reshape(cin0, P)
    x = jnp.pad(x, ((0, C - cin0), (0, P_pad - P)))
    masks, vcol = _make_masks(N, H, W, P, P_pad)

    # Explicit VMEM budget: x + act + out + 9-tap im2col, double-buffered per-layer
    # params, tiny masks; capped below v7x's 64 MiB physical VMEM.
    act_bytes = 4 * C * P_pad
    need = (12 * act_bytes
            + 2 * 4 * (9 * C * C + 3 * C)
            + 4 * 9 * P_pad)
    vmem_limit = int(min(max(2 * need, 8 << 20), 64 << 20))

    kern = functools.partial(uisnet_layer_kernel, W=W, C=C, P_real=P, P_pad=P_pad)
    out = pl.pallas_call(
        kern,
        out_shape=jax.ShapeDtypeStruct((C, P_pad), jnp.float32),
        grid_spec=pltpu.PrefetchScalarGridSpec(
            num_scalar_prefetch=0,
            grid=(L,),
            in_specs=[
                pl.BlockSpec((C, P_pad), lambda l: (0, 0)),            # x (resident)
                pl.BlockSpec((None, C, 9 * C), lambda l: (l, 0, 0)),   # per-layer weights
                pl.BlockSpec((None, C, 1), lambda l: (l, 0, 0)),       # per-layer bias
                pl.BlockSpec((None, C, 1), lambda l: (l, 0, 0)),       # per-layer gamma
                pl.BlockSpec((None, C, 1), lambda l: (l, 0, 0)),       # per-layer beta
                pl.BlockSpec((8, P_pad), lambda l: (0, 0)),            # border masks
                pl.BlockSpec((P_pad, 1), lambda l: (0, 0)),            # validity column
            ],
            out_specs=pl.BlockSpec((C, P_pad), lambda l: (0, 0)),
            scratch_shapes=[pltpu.VMEM((C, P_pad), jnp.float32),       # persistent activation
                            pltpu.VMEM((9 * C, P_pad), jnp.float32)],  # im2col scratch
        ),
        compiler_params=pltpu.CompilerParams(
            dimension_semantics=("arbitrary",),
            vmem_limit_bytes=vmem_limit,
        ),
    )(x, w_all, b_all, g_all, bt_all, masks, vcol)
    # TODO(synk): for large images, tile the pixel axis (row-/image-aligned tiles) with a
    # two-phase BN (per-tile partial s1/s2 + finalize) and a "parallel" tile axis so the
    # working set fits v7x's 64 MiB VMEM and both v7x TensorCores are used; at these demo
    # sizes everything fits in VMEM, so the only grid axis is the (sequential) layer axis.
    # TODO(synk): on v6e/v7x, store act/xcol/weights in bfloat16 (f32 BN math) to halve
    # VMEM/HBM bytes; kept f32 here to match the PyTorch-f32 reference exactly.
    out = out[:F, :P].reshape(F, N, H, W)
    return jnp.transpose(out, (1, 0, 2, 3))


# ---------------- pure-JAX reference (same math path) ----------------
def _layer_ref(x, w, b, gamma, beta, ksize):
    N, H, W, Cin = x.shape
    Cout = w.shape[-1]
    pad = ksize // 2
    xp = jnp.pad(x, ((0, 0), (pad, pad), (pad, pad), (0, 0))) if pad else x
    acc = jnp.zeros((N, H, W, Cout), jnp.float32)
    for dy in range(ksize):
        for dx in range(ksize):
            acc = acc + jnp.einsum('nhwc,cd->nhwd',
                                   xp[:, dy:dy + H, dx:dx + W, :],
                                   w[dy * ksize + dx])
    acc = acc + b.reshape(1, 1, 1, Cout)
    acc = jnp.maximum(acc, 0.0)
    mean = jnp.mean(acc, axis=(0, 1, 2), keepdims=True)
    var = jnp.mean((acc - mean) ** 2, axis=(0, 1, 2), keepdims=True)
    return ((acc - mean) * jax.lax.rsqrt(var + EPS)
            * gamma.reshape(1, 1, 1, Cout) + beta.reshape(1, 1, 1, Cout))


def uisnet_ref(x_nchw, params):
    x = jnp.transpose(x_nchw, (0, 2, 3, 1)).astype(jnp.float32)
    for (w, b, gamma, beta, ksize) in params:
        x = _layer_ref(x, w, b, gamma, beta, ksize)
    return jnp.transpose(x, (0, 3, 1, 2))


# ---------------- deterministic parameter construction ----------------
def init_params(key, n_pixel_features, n_mid_convs):
    """Layer list matching UISNet.__init__:
       Conv(3->F,3x3,pad=1), n_mid_convs x Conv(F->F,3x3,pad=1), Conv(F->F,1x1); BN after each."""
    layer_defs = [(3, n_pixel_features, 3)]
    layer_defs += [(n_pixel_features, n_pixel_features, 3)] * n_mid_convs
    layer_defs += [(n_pixel_features, n_pixel_features, 1)]
    params = []
    for (cin, cout, k) in layer_defs:
        key, kw, kb = jax.random.split(key, 3)
        fan_in = cin * k * k
        w = (jax.random.normal(kw, (k * k, cin, cout), jnp.float32)
             * (1.0 / math.sqrt(fan_in)))
        b = jax.random.normal(kb, (1, cout), jnp.float32) * 0.05
        gamma = jnp.ones((1, cout), jnp.float32)    # PyTorch BN default weight
        beta = jnp.zeros((1, cout), jnp.float32)    # PyTorch BN default bias
        params.append((w, b, gamma, beta, k))
    return params


if __name__ == "__main__":
    N, H, W = 2, 16, 16
    n_pixel_features, n_mid_convs = 8, 2

    key = jax.random.PRNGKey(0)
    key, kx = jax.random.split(key)
    x = jax.random.normal(kx, (N, 3, H, W), jnp.float32)   # NCHW, 3 input channels

    params = init_params(key, n_pixel_features, n_mid_convs)

    out = uisnet_forward(x, params)
    out = jax.block_until_ready(out)

    ref = uisnet_ref(x, params)
    err = float(jnp.max(jnp.abs(out - ref)))
    assert out.shape == (N, n_pixel_features, H, W), out.shape
    assert err < 2e-2, f"max abs error {err}"
    print("KERNEL_OK")
</pallas_src>

<mosaic_0001>
module attributes {stable_mosaic.version = 11 : i64} {
  func.func @uisnet_layer_kernel(%arg0: i32, %arg1: memref<8x512xf32, #tpu.memory_space<vmem>>, %arg2: memref<1x8x72xf32, #tpu.memory_space<vmem>>, %arg3: memref<1x8x1xf32, #tpu.memory_space<vmem>>, %arg4: memref<1x8x1xf32, #tpu.memory_space<vmem>>, %arg5: memref<1x8x1xf32, #tpu.memory_space<vmem>>, %arg6: memref<8x512xf32, #tpu.memory_space<vmem>>, %arg7: memref<512x1xf32, #tpu.memory_space<vmem>>, %arg8: memref<8x512xf32, #tpu.memory_space<vmem>>, %arg9: memref<8x512xf32, #tpu.memory_space<vmem>>, %arg10: memref<72x512xf32, #tpu.memory_space<vmem>>) attributes {dimension_semantics = [#tpu.dimension_semantics<arbitrary>], iteration_bounds = array<i64: 4>, scalar_prefetch = 0 : i64, scratch_operands = 2 : i64, tpu.core_type = #tpu.core_type<tc>, window_params = [{pipeline_mode = #tpu.pipeline_mode<synchronous>, transform_indices = @transform_0, window_bounds = array<i64: 8, 512>}, {transform_indices = @transform_1, window_bounds = array<i64: 1, 8, 72>}, {transform_indices = @transform_2, window_bounds = array<i64: 1, 8, 1>}, {transform_indices = @transform_3, window_bounds = array<i64: 1, 8, 1>}, {transform_indices = @transform_4, window_bounds = array<i64: 1, 8, 1>}, {pipeline_mode = #tpu.pipeline_mode<synchronous>, transform_indices = @transform_5, window_bounds = array<i64: 8, 512>}, {pipeline_mode = #tpu.pipeline_mode<synchronous>, transform_indices = @transform_6, window_bounds = array<i64: 512, 1>}, {pipeline_mode = #tpu.pipeline_mode<synchronous>, transform_indices = @transform_7, window_bounds = array<i64: 8, 512>}]} {
    %c0_i32 = arith.constant 0 : i32
    %0 = arith.cmpi eq, %arg0, %c0_i32 : i32
    %1 = arith.extui %0 : i1 to i32
    %c0_i32_0 = arith.constant 0 : i32
    %2 = arith.cmpi ne, %1, %c0_i32_0 : i32
    scf.if %2 {
      %c0_42 = arith.constant 0 : index
      %c0_43 = arith.constant 0 : index
      %81 = vector.load %arg1[%c0_42, %c0_43] : memref<8x512xf32, #tpu.memory_space<vmem>>, vector<8x512xf32>
      %c0_44 = arith.constant 0 : index
      %c0_45 = arith.constant 0 : index
      %82 = vector.load %arg9[%c0_44, %c0_45] : memref<8x512xf32, #tpu.memory_space<vmem>>, vector<8x512xf32>
      tpu.vector_store %arg9[%c0_44, %c0_45], %81 {strides = array<i32>} : memref<8x512xf32, #tpu.memory_space<vmem>>, vector<8x512xf32>,
    } else {
    }
    %c0 = arith.constant 0 : index
    %c0_1 = arith.constant 0 : index
    %3 = vector.load %arg9[%c0, %c0_1] : memref<8x512xf32, #tpu.memory_space<vmem>>, vector<8x512xf32>
    %c0_2 = arith.constant 0 : index
    %c0_3 = arith.constant 0 : index
    %4 = vector.load %arg6[%c0_2, %c0_3] : memref<8x512xf32, #tpu.memory_space<vmem>>, vector<1x512xf32>
    %c1 = arith.constant 1 : index
    %c0_4 = arith.constant 0 : index
    %5 = vector.load %arg6[%c1, %c0_4] : memref<8x512xf32, #tpu.memory_space<vmem>>, vector<1x512xf32>
    %c2 = arith.constant 2 : index
    %c0_5 = arith.constant 0 : index
    %6 = vector.load %arg6[%c2, %c0_5] : memref<8x512xf32, #tpu.memory_space<vmem>>, vector<1x512xf32>
    %c3 = arith.constant 3 : index
    %c0_6 = arith.constant 0 : index
    %7 = vector.load %arg6[%c3, %c0_6] : memref<8x512xf32, #tpu.memory_space<vmem>>, vector<1x512xf32>
    %c17_i32 = arith.constant 17 : i32
    %8 = tpu.dynamic_rotate %3 by %c17_i32 dim 1 : vector<8x512xf32>, i32 -> vector<8x512xf32>
    %9 = arith.mulf %4, %6 : vector<1x512xf32>
    %10 = vector.broadcast %9 : vector<1x512xf32> to vector<8x512xf32>
    %11 = arith.mulf %8, %10 : vector<8x512xf32>
    %c0_7 = arith.constant 0 : index
    %c0_8 = arith.constant 0 : index
    %12 = vector.load %arg10[%c0_7, %c0_8] : memref<72x512xf32, #tpu.memory_space<vmem>>, vector<8x512xf32>
    tpu.vector_store %arg10[%c0_7, %c0_8], %11 {strides = array<i32>} : memref<72x512xf32, #tpu.memory_space<vmem>>, vector<8x512xf32>,
    %c16_i32 = arith.constant 16 : i32
    %13 = tpu.dynamic_rotate %3 by %c16_i32 dim 1 : vector<8x512xf32>, i32 -> vector<8x512xf32>
    %14 = vector.broadcast %4 : vector<1x512xf32> to vector<8x512xf32>
    %15 = arith.mulf %13, %14 : vector<8x512xf32>
    %c8 = arith.constant 8 : index
    %c0_9 = arith.constant 0 : index
    %16 = vector.load %arg10[%c8, %c0_9] : memref<72x512xf32, #tpu.memory_space<vmem>>, vector<8x512xf32>
    tpu.vector_store %arg10[%c8, %c0_9], %15 {strides = array<i32>} : memref<72x512xf32, #tpu.memory_space<vmem>>, vector<8x512xf32>,
    %c15_i32 = arith.constant 15 : i32
    %17 = tpu.dynamic_rotate %3 by %c15_i32 dim 1 : vector<8x512xf32>, i32 -> vector<8x512xf32>
    %18 = arith.mulf %4, %7 : vector<1x512xf32>
    %19 = vector.broadcast %18 : vector<1x512xf32> to vector<8x512xf32>
    %20 = arith.mulf %17, %19 : vector<8x512xf32>
    %c16 = arith.constant 16 : index
    %c0_10 = arith.constant 0 : index
    %21 = vector.load %arg10[%c16, %c0_10] : memref<72x512xf32, #tpu.memory_space<vmem>>, vector<8x512xf32>
    tpu.vector_store %arg10[%c16, %c0_10], %20 {strides = array<i32>} : memref<72x512xf32, #tpu.memory_space<vmem>>, vector<8x512xf32>,
    %c1_i32 = arith.constant 1 : i32
    %22 = tpu.dynamic_rotate %3 by %c1_i32 dim 1 : vector<8x512xf32>, i32 -> vector<8x512xf32>
    %23 = vector.broadcast %6 : vector<1x512xf32> to vector<8x512xf32>
    %24 = arith.mulf %22, %23 : vector<8x512xf32>
    %c24 = arith.constant 24 : index
    %c0_11 = arith.constant 0 : index
    %25 = vector.load %arg10[%c24, %c0_11] : memref<72x512xf32, #tpu.memory_space<vmem>>, vector<8x512xf32>
    tpu.vector_store %arg10[%c24, %c0_11], %24 {strides = array<i32>} : memref<72x512xf32, #tpu.memory_space<vmem>>, vector<8x512xf32>,
    %c32 = arith.constant 32 : index
    %c0_12 = arith.constant 0 : index
    %26 = vector.load %arg10[%c32, %c0_12] : memref<72x512xf32, #tpu.memory_space<vmem>>, vector<8x512xf32>
    tpu.vector_store %arg10[%c32, %c0_12], %3 {strides = array<i32>} : memref<72x512xf32, #tpu.memory_space<vmem>>, vector<8x512xf32>,
    %c511_i32 = arith.constant 511 : i32
    %27 = tpu.dynamic_rotate %3 by %c511_i32 dim 1 : vector<8x512xf32>, i32 -> vector<8x512xf32>
    %28 = vector.broadcast %7 : vector<1x512xf32> to vector<8x512xf32>
    %29 = arith.mulf %27, %28 : vector<8x512xf32>
    %c40 = arith.constant 40 : index
    %c0_13 = arith.constant 0 : index
    %30 = vector.load %arg10[%c40, %c0_13] : memref<72x512xf32, #tpu.memory_space<vmem>>, vector<8x512xf32>
    tpu.vector_store %arg10[%c40, %c0_13], %29 {strides = array<i32>} : memref<72x512xf32, #tpu.memory_space<vmem>>, vector<8x512xf32>,
    %c497_i32 = arith.constant 497 : i32
    %31 = tpu.dynamic_rotate %3 by %c497_i32 dim 1 : vector<8x512xf32>, i32 -> vector<8x512xf32>
    %32 = arith.mulf %5, %6 : vector<1x512xf32>
    %33 = vector.broadcast %32 : vector<1x512xf32> to vector<8x512xf32>
    %34 = arith.mulf %31, %33 : vector<8x512xf32>
    %c48 = arith.constant 48 : index
    %c0_14 = arith.constant 0 : index
    %35 = vector.load %arg10[%c48, %c0_14] : memref<72x512xf32, #tpu.memory_space<vmem>>, vector<8x512xf32>
    tpu.vector_store %arg10[%c48, %c0_14], %34 {strides = array<i32>} : memref<72x512xf32, #tpu.memory_space<vmem>>, vector<8x512xf32>,
    %c496_i32 = arith.constant 496 : i32
    %36 = tpu.dynamic_rotate %3 by %c496_i32 dim 1 : vector<8x512xf32>, i32 -> vector<8x512xf32>
    %37 = vector.broadcast %5 : vector<1x512xf32> to vector<8x512xf32>
    %38 = arith.mulf %36, %37 : vector<8x512xf32>
    %c56 = arith.constant 56 : index
    %c0_15 = arith.constant 0 : index
    %39 = vector.load %arg10[%c56, %c0_15] : memref<72x512xf32, #tpu.memory_space<vmem>>, vector<8x512xf32>
    tpu.vector_store %arg10[%c56, %c0_15], %38 {strides = array<i32>} : memref<72x512xf32, #tpu.memory_space<vmem>>, vector<8x512xf32>,
    %c495_i32 = arith.constant 495 : i32
    %40 = tpu.dynamic_rotate %3 by %c495_i32 dim 1 : vector<8x512xf32>, i32 -> vector<8x512xf32>
    %41 = arith.mulf %5, %7 : vector<1x512xf32>
    %42 = vector.broadcast %41 : vector<1x512xf32> to vector<8x512xf32>
    %43 = arith.mulf %40, %42 : vector<8x512xf32>
    %c64 = arith.constant 64 : index
    %c0_16 = arith.constant 0 : index
    %44 = vector.load %arg10[%c64, %c0_16] : memref<72x512xf32, #tpu.memory_space<vmem>>, vector<8x512xf32>
    tpu.vector_store %arg10[%c64, %c0_16], %43 {strides = array<i32>} : memref<72x512xf32, #tpu.memory_space<vmem>>, vector<8x512xf32>,
    %c0_17 = arith.constant 0 : index
    %c0_18 = arith.constant 0 : index
    %c0_19 = arith.constant 0 : index
    %45 = vector.load %arg2[%c0_17, %c0_18, %c0_19] : memref<1x8x72xf32, #tpu.memory_space<vmem>>, vector<1x8x72xf32>
    %46 = vector.shape_cast %45 : vector<1x8x72xf32> to vector<8x72xf32>
    %c0_20 = arith.constant 0 : index
    %c0_21 = arith.constant 0 : index
    %47 = vector.load %arg10[%c0_20, %c0_21] : memref<72x512xf32, #tpu.memory_space<vmem>>, vector<72x512xf32>
    %cst = arith.constant dense<0.000000e+00> : vector<8x512xf32>
    %48 = tpu.matmul %46, %47, %cst {dimension_numbers = #tpu.dot_dimension_numbers<[1], [0], [0], [1], [0, 0, 1, 1], [], []>} : vector<8x72xf32>, vector<72x512xf32>, vector<8x512xf32> -> vector<8x512xf32>
    %c0_22 = arith.constant 0 : index
    %c0_23 = arith.constant 0 : index
    %c0_24 = arith.constant 0 : index
    %49 = vector.load %arg3[%c0_22, %c0_23, %c0_24] : memref<1x8x1xf32, #tpu.memory_space<vmem>>, vector<1x8x1xf32>
    %50 = vector.shape_cast %49 : vector<1x8x1xf32> to vector<8x1xf32>
    %51 = vector.broadcast %50 : vector<8x1xf32> to vector<8x512xf32>
    %52 = arith.addf %48, %51 : vector<8x512xf32>
    %cst_25 = arith.constant 0.000000e+00 : f32
    %53 = vector.broadcast %cst_25 : f32 to vector<8x512xf32>
    %54 = arith.maximumf %52, %53 : vector<8x512xf32>
    %c0_26 = arith.constant 0 : index
    %c0_27 = arith.constant 0 : index
    %55 = vector.load %arg7[%c0_26, %c0_27] : memref<512x1xf32, #tpu.memory_space<vmem>>, vector<512x1xf32>
    %cst_28 = arith.constant dense<0.000000e+00> : vector<8x1xf32>
    %56 = tpu.matmul %54, %55, %cst_28 {dimension_numbers = #tpu.dot_dimension_numbers<[1], [0], [0], [1], [0, 0, 1, 1], [], []>} : vector<8x512xf32>, vector<512x1xf32>, vector<8x1xf32> -> vector<8x1xf32>
    %cst_29 = arith.constant 0.001953125 : f32
    %57 = vector.broadcast %cst_29 : f32 to vector<8x1xf32>
    %58 = arith.mulf %56, %57 : vector<8x1xf32>
    %59 = vector.broadcast %58 : vector<8x1xf32> to vector<8x512xf32>
    %60 = arith.subf %54, %59 : vector<8x512xf32>
    %61 = arith.mulf %60, %60 : vector<8x512xf32>
    %cst_30 = arith.constant dense<0.000000e+00> : vector<8x1xf32>
    %62 = tpu.matmul %61, %55, %cst_30 {dimension_numbers = #tpu.dot_dimension_numbers<[1], [0], [0], [1], [0, 0, 1, 1], [], []>} : vector<8x512xf32>, vector<512x1xf32>, vector<8x1xf32> -> vector<8x1xf32>
    %cst_31 = arith.constant 0.001953125 : f32
    %63 = vector.broadcast %cst_31 : f32 to vector<8x1xf32>
    %64 = arith.mulf %62, %63 : vector<8x1xf32>
    %c0_32 = arith.constant 0 : index
    %c0_33 = arith.constant 0 : index
    %c0_34 = arith.constant 0 : index
    %65 = vector.load %arg4[%c0_32, %c0_33, %c0_34] : memref<1x8x1xf32, #tpu.memory_space<vmem>>, vector<1x8x1xf32>
    %66 = vector.shape_cast %65 : vector<1x8x1xf32> to vector<8x1xf32>
    %cst_35 = arith.constant 9.99999974E-6 : f32
    %67 = vector.broadcast %cst_35 : f32 to vector<8x1xf32>
    %68 = arith.addf %64, %67 : vector<8x1xf32>
    %69 = math.rsqrt %68 : vector<8x1xf32>
    %70 = arith.mulf %66, %69 : vector<8x1xf32>
    %71 = vector.broadcast %70 : vector<8x1xf32> to vector<8x512xf32>
    %72 = arith.mulf %60, %71 : vector<8x512xf32>
    %c0_36 = arith.constant 0 : index
    %c0_37 = arith.constant 0 : index
    %c0_38 = arith.constant 0 : index
    %73 = vector.load %arg5[%c0_36, %c0_37, %c0_38] : memref<1x8x1xf32, #tpu.memory_space<vmem>>, vector<1x8x1xf32>
    %74 = vector.shape_cast %73 : vector<1x8x1xf32> to vector<8x1xf32>
    %75 = vector.broadcast %74 : vector<8x1xf32> to vector<8x512xf32>
    %76 = arith.addf %72, %75 : vector<8x512xf32>
    %c0_39 = arith.constant 0 : index
    %c0_40 = arith.constant 0 : index
    %77 = vector.load %arg9[%c0_39, %c0_40] : memref<8x512xf32, #tpu.memory_space<vmem>>, vector<8x512xf32>
    tpu.vector_store %arg9[%c0_39, %c0_40], %76 {strides = array<i32>} : memref<8x512xf32, #tpu.memory_space<vmem>>, vector<8x512xf32>,
    %c3_i32 = arith.constant 3 : i32
    %78 = arith.cmpi eq, %arg0, %c3_i32 : i32
    %79 = arith.extui %78 : i1 to i32
    %c0_i32_41 = arith.constant 0 : i32
    %80 = arith.cmpi ne, %79, %c0_i32_41 : i32
    scf.if %80 {
      %c0_42 = arith.constant 0 : index
      %c0_43 = arith.constant 0 : index
      %81 = vector.load %arg8[%c0_42, %c0_43] : memref<8x512xf32, #tpu.memory_space<vmem>>, vector<8x512xf32>
      tpu.vector_store %arg8[%c0_42, %c0_43], %76 {strides = array<i32>} : memref<8x512xf32, #tpu.memory_space<vmem>>, vector<8x512xf32>,
    } else {
    }
    return
  }
  func.func @transform_0(%arg0: i32) -> (i32, i32) {
    %c0_i32 = arith.constant 0 : i32
    %c0_i32_0 = arith.constant 0 : i32
    %c0_i32_1 = arith.constant 0 : i32
    return %c0_i32, %c0_i32_0 : i32, i32
  }
  func.func @transform_1(%arg0: i32) -> (i32, i32, i32) {
    %c0_i32 = arith.constant 0 : i32
    %c0_i32_0 = arith.constant 0 : i32
    %c0_i32_1 = arith.constant 0 : i32
    return %arg0, %c0_i32, %c0_i32_0 : i32, i32, i32
  }
  func.func @transform_2(%arg0: i32) -> (i32, i32, i32) {
    %c0_i32 = arith.constant 0 : i32
    %c0_i32_0 = arith.constant 0 : i32
    %c0_i32_1 = arith.constant 0 : i32
    return %arg0, %c0_i32, %c0_i32_0 : i32, i32, i32
  }
  func.func @transform_3(%arg0: i32) -> (i32, i32, i32) {
    %c0_i32 = arith.constant 0 : i32
    %c0_i32_0 = arith.constant 0 : i32
    %c0_i32_1 = arith.constant 0 : i32
    return %arg0, %c0_i32, %c0_i32_0 : i32, i32, i32
  }
  func.func @transform_4(%arg0: i32) -> (i32, i32, i32) {
    %c0_i32 = arith.constant 0 : i32
    %c0_i32_0 = arith.constant 0 : i32
    %c0_i32_1 = arith.constant 0 : i32
    return %arg0, %c0_i32, %c0_i32_0 : i32, i32, i32
  }
  func.func @transform_5(%arg0: i32) -> (i32, i32) {
    %c0_i32 = arith.constant 0 : i32
    %c0_i32_0 = arith.constant 0 : i32
    %c0_i32_1 = arith.constant 0 : i32
    return %c0_i32, %c0_i32_0 : i32, i32
  }
  func.func @transform_6(%arg0: i32) -> (i32, i32) {
    %c0_i32 = arith.constant 0 : i32
    %c0_i32_0 = arith.constant 0 : i32
    %c0_i32_1 = arith.constant 0 : i32
    return %c0_i32, %c0_i32_0 : i32, i32
  }
  func.func @transform_7(%arg0: i32) -> (i32, i32) {
    %c0_i32 = arith.constant 0 : i32
    %c0_i32_0 = arith.constant 0 : i32
    %c0_i32_1 = arith.constant 0 : i32
    return %c0_i32, %c0_i32_0 : i32, i32
  }
}

</mosaic_0001>

<llo_original>
// kernel: tpu_custom_call.1
$region0: #{tpu_custom_call.1}
  #allocation0 [shape = 'u32[]', space=smem, size = 0x4, offset = 0x4, fixed_abs, tag = 'smem constant byte address 0x4 - core index']
  #allocation1 [shape = 'u32[144,128]{1,0:T(1,128)}', space=vmem, size = 0x12000, scoped, tag = 'internal scratch']
  #allocation2 [shape = 'f32[8,512]{1,0:T(8,128)}', space=vmem, size = 0x4000, scoped, tag = 'scratch operand']
  #allocation3 [shape = 'f32[72,512]{1,0:T(8,128)}', space=vmem, size = 0x24000, scoped, tag = 'scratch operand']
  %s0 = inlined_call_operand.vmem [shape: f32[8,512], index: 0, kind: input, shape index: {}]
  %s1 = inlined_call_operand.vmem [shape: f32[4,8,72], index: 1, kind: input, shape index: {}]
  %s2 = inlined_call_operand.vmem [shape: f32[4,8,1], index: 2, kind: input, shape index: {}]
  %s3 = inlined_call_operand.vmem [shape: f32[4,8,1], index: 3, kind: input, shape index: {}]
  %s4 = inlined_call_operand.vmem [shape: f32[4,8,1], index: 4, kind: input, shape index: {}]
  %s5 = inlined_call_operand.vmem [shape: f32[8,512], index: 5, kind: input, shape index: {}]
  %s6 = inlined_call_operand.vmem [shape: f32[512,1], index: 6, kind: input, shape index: {}]
  %s7 = inlined_call_operand.hbm [shape: f32[8,512], index: 7, kind: output, shape index: {}]
  %s8 = sld [smem:[#allocation0]]
  $region69: #{tpu_custom_call.1} parent=0
    _
  %s10 = ssub.s32 1, %s8
  %s11 = scalar_select 0, %s10, %s8
  $region1: #{tpu_custom_call.1} parent=0
    #allocation4 [shape = 'u8[16384]{0}', space=vmem, size = 0x4000, scoped, tag = 'output window, operand 0, single buffered']
    #allocation5 [shape = 's32[2]{0}', space=sflag, size = 0x8, scoped, tag = 'scoped memory for tpu_custom_call.1']
    %12 = vsyncpa [#allocation5], 0
    loop: start=0, step=1, limit=6
    $region2: #{tpu_custom_call.1} parent=1 // loop_pre_header
      _
    $region3: #{tpu_custom_call.1} parent=1 // loop_header
      %s14 = sphi 0, %s18
      %p15 = scmp.ge.s32.totalorder %s14, 6
      %s22 = sphi 0, %s22
      %s24 = sphi 0, %s22
      %s25 = sphi 0, %s24
      %s39 = sphi 0, %s25
      %s45 = sphi 0, %s47
      %s48 = sphi 0, %s45
      %s49 = sphi 0, %s48
      %s65 = sphi 0, %s49
      %s71 = sphi 0, %s73
      %s74 = sphi 0, %s71
      %s75 = sphi 0, %s74
      %s91 = sphi 0, %s75
      %s97 = sphi 0, %s99
      %s100 = sphi 0, %s97
      %s101 = sphi 0, %s100
      %s117 = sphi 0, %s101
      %s123 = sphi 0, %s125
      %s126 = sphi 0, %s123
      %s127 = sphi 0, %s126
      %s143 = sphi 0, %s127
      %s147 = sphi 0, %s147
      %s149 = sphi 0, %s147
      %s150 = sphi 0, %s149
      %s164 = sphi 0, %s150
      %s168 = sphi 0, %s168
      %s170 = sphi 0, %s168
      %s171 = sphi 0, %s170
      %s185 = sphi 0, %s171
      %s189 = sphi 0, %s189
      %s191 = sphi 0, %s189
      %s192 = sphi 0, %s191
      %s206 = sphi 0, %s192
    $region4: #{tpu_custom_call.1} parent=1 // loop_header_branch
      %17 = sbr.rel (%p15) target = $region8
    $region5: #{tpu_custom_call.1} parent=1 // loop_body
      %s19 = ssub.s32 %s14, 1
      %s20 = ssub.s32 %s14, 2
      %s21 = sadd.s32 %s14, 1
      %s23 = sadd.s32 %s22, 1
      %p26 = scmp.eq.s32.totalorder %s14, 3
      %p27 = scmp.ne.s32.totalorder %s22, %s24
      %p28 = scmp.eq.s32.totalorder %s14, 0
      %p29 = por %p27, %p28
      %p30 = scmp.ne.s32.totalorder %s22, %s24
      %p31 = scmp.eq.s32.totalorder %s19, 3
      %p32 = por %p30, %p31
      %p33 = scmp.ne.s32.totalorder %s24, %s25
      %p34 = scmp.eq.s32.totalorder %s19, 0
      %p35 = por %p33, %p34
      %p36 = scmp.ne.s32.totalorder %s24, %s25
      %p37 = scmp.eq.s32.totalorder %s20, 3
      %p38 = por %p36, %p37
      %p40 = scmp.ne.s32.totalorder %s25, %s39
      %p41 = scmp.eq.s32.totalorder %s20, 0
      %p42 = por %p40, %p41
      %s43 = ssub.s32 %s14, %s21
      %p44 = scmp.eq.s32.totalorder %s43, 0
      %s46 = sadd.s32 %s45, 1
      %s47 = scalar_select %p44, %s45, %s46
      %p50 = pneg %p44
      %p51 = scmp.eq.s32.totalorder %s14, 3
      %p52 = por %p50, %p51
      %p53 = scmp.ne.s32.totalorder %s45, %s48
      %p54 = scmp.eq.s32.totalorder %s14, 0
      %p55 = por %p53, %p54
      %p56 = scmp.ne.s32.totalorder %s45, %s48
      %p57 = scmp.eq.s32.totalorder %s19, 3
      %p58 = por %p56, %p57
      %p59 = scmp.ne.s32.totalorder %s48, %s49
      %p60 = scmp.eq.s32.totalorder %s19, 0
      %p61 = por %p59, %p60
      %p62 = scmp.ne.s32.totalorder %s48, %s49
      %p63 = scmp.eq.s32.totalorder %s20, 3
      %p64 = por %p62, %p63
      %p66 = scmp.ne.s32.totalorder %s49, %s65
      %p67 = scmp.eq.s32.totalorder %s20, 0
      %p68 = por %p66, %p67
      %s69 = ssub.s32 %s14, %s21
      %p70 = scmp.eq.s32.totalorder %s69, 0
      %s72 = sadd.s32 %s71, 1
      %s73 = scalar_select %p70, %s71, %s72
      %p76 = pneg %p70
      %p77 = scmp.eq.s32.totalorder %s14, 3
      %p78 = por %p76, %p77
      %p79 = scmp.ne.s32.totalorder %s71, %s74
      %p80 = scmp.eq.s32.totalorder %s14, 0
      %p81 = por %p79, %p80
      %p82 = scmp.ne.s32.totalorder %s71, %s74
      %p83 = scmp.eq.s32.totalorder %s19, 3
      %p84 = por %p82, %p83
      %p85 = scmp.ne.s32.totalorder %s74, %s75
      %p86 = scmp.eq.s32.totalorder %s19, 0
      %p87 = por %p85, %p86
      %p88 = scmp.ne.s32.totalorder %s74, %s75
      %p89 = scmp.eq.s32.totalorder %s20, 3
      %p90 = por %p88, %p89
      %p92 = scmp.ne.s32.totalorder %s75, %s91
      %p93 = scmp.eq.s32.totalorder %s20, 0
      %p94 = por %p92, %p93
      %s95 = ssub.s32 %s14, %s21
      %p96 = scmp.eq.s32.totalorder %s95, 0
      %s98 = sadd.s32 %s97, 1
      %s99 = scalar_select %p96, %s97, %s98
      %p102 = pneg %p96
      %p103 = scmp.eq.s32.totalorder %s14, 3
      %p104 = por %p102, %p103
      %p105 = scmp.ne.s32.totalorder %s97, %s100
      %p106 = scmp.eq.s32.totalorder %s14, 0
      %p107 = por %p105, %p106
      %p108 = scmp.ne.s32.totalorder %s97, %s100
      %p109 = scmp.eq.s32.totalorder %s19, 3
      %p110 = por %p108, %p109
      %p111 = scmp.ne.s32.totalorder %s100, %s101
      %p112 = scmp.eq.s32.totalorder %s19, 0
      %p113 = por %p111, %p112
      %p114 = scmp.ne.s32.totalorder %s100, %s101
      %p115 = scmp.eq.s32.totalorder %s20, 3
      %p116 = por %p114, %p115
      %p118 = scmp.ne.s32.totalorder %s101, %s117
      %p119 = scmp.eq.s32.totalorder %s20, 0
      %p120 = por %p118, %p119
      %s121 = ssub.s32 %s14, %s21
      %p122 = scmp.eq.s32.totalorder %s121, 0
      %s124 = sadd.s32 %s123, 1
      %s125 = scalar_select %p122, %s123, %s124
      %p128 = pneg %p122
      %p129 = scmp.eq.s32.totalorder %s14, 3
      %p130 = por %p128, %p129
      %p131 = scmp.ne.s32.totalorder %s123, %s126
      %p132 = scmp.eq.s32.totalorder %s14, 0
      %p133 = por %p131, %p132
      %p134 = scmp.ne.s32.totalorder %s123, %s126
      %p135 = scmp.eq.s32.totalorder %s19, 3
      %p136 = por %p134, %p135
      %p137 = scmp.ne.s32.totalorder %s126, %s127
      %p138 = scmp.eq.s32.totalorder %s19, 0
      %p139 = por %p137, %p138
      %p140 = scmp.ne.s32.totalorder %s126, %s127
      %p141 = scmp.eq.s32.totalorder %s20, 3
      %p142 = por %p140, %p141
      %p144 = scmp.ne.s32.totalorder %s127, %s143
      %p145 = scmp.eq.s32.totalorder %s20, 0
      %p146 = por %p144, %p145
      %s148 = sadd.s32 %s147, 1
      %p151 = scmp.eq.s32.totalorder %s14, 3
      %p152 = scmp.ne.s32.totalorder %s147, %s149
      %p153 = scmp.eq.s32.totalorder %s14, 0
      %p154 = por %p152, %p153
      %p155 = scmp.ne.s32.totalorder %s147, %s149
      %p156 = scmp.eq.s32.totalorder %s19, 3
      %p157 = por %p155, %p156
      %p158 = scmp.ne.s32.totalorder %s149, %s150
      %p159 = scmp.eq.s32.totalorder %s19, 0
      %p160 = por %p158, %p159
      %p161 = scmp.ne.s32.totalorder %s149, %s150
      %p162 = scmp.eq.s32.totalorder %s20, 3
      %p163 = por %p161, %p162
      %p165 = scmp.ne.s32.totalorder %s150, %s164
      %p166 = scmp.eq.s32.totalorder %s20, 0
      %p167 = por %p165, %p166
      %s169 = sadd.s32 %s168, 1
      %p172 = scmp.eq.s32.totalorder %s14, 3
      %p173 = scmp.ne.s32.totalorder %s168, %s170
      %p174 = scmp.eq.s32.totalorder %s14, 0
      %p175 = por %p173, %p174
      %p176 = scmp.ne.s32.totalorder %s168, %s170
      %p177 = scmp.eq.s32.totalorder %s19, 3
      %p178 = por %p176, %p177
      %p179 = scmp.ne.s32.totalorder %s170, %s171
      %p180 = scmp.eq.s32.totalorder %s19, 0
      %p181 = por %p179, %p180
      %p182 = scmp.ne.s32.totalorder %s170, %s171
      %p183 = scmp.eq.s32.totalorder %s20, 3
      %p184 = por %p182, %p183
      %p186 = scmp.ne.s32.totalorder %s171, %s185
      %p187 = scmp.eq.s32.totalorder %s20, 0
      %p188 = por %p186, %p187
      %s190 = sadd.s32 %s189, 1
      %p193 = scmp.eq.s32.totalorder %s14, 3
      %p194 = scmp.ne.s32.totalorder %s189, %s191
      %p195 = scmp.eq.s32.totalorder %s14, 0
      %p196 = por %p194, %p195
      %p197 = scmp.ne.s32.totalorder %s189, %s191
      %p198 = scmp.eq.s32.totalorder %s19, 3
      %p199 = por %p197, %p198
      %p200 = scmp.ne.s32.totalorder %s191, %s192
      %p201 = scmp.eq.s32.totalorder %s19, 0
      %p202 = por %p200, %p201
      %p203 = scmp.ne.s32.totalorder %s191, %s192
      %p204 = scmp.eq.s32.totalorder %s20, 3
      %p205 = por %p203, %p204
      %p207 = scmp.ne.s32.totalorder %s192, %s206
      %p208 = scmp.eq.s32.totalorder %s20, 0
      %p209 = por %p207, %p208
      %p210 = scmp.le.s32.totalorder 1, %s14
      %p211 = scmp.lt.s32.totalorder %s14, 5
      %p212 = pnand %p210, %p211
      %p213 = pneg %p212
      // Predicated region
      $region9: #{tpu_custom_call.1} parent=5 // pred_check
        _
      $region10: #{tpu_custom_call.1} parent=5 // pred_check_branch
        %215 = sbr.rel (%p212) target = $region12
      $region11: #{tpu_custom_call.1} parent=5 // pred_region
        %s216 = ssub.s32 %s14, 1
        // Predicated region
        $region13: #{tpu_custom_call.1} parent=11 // pred_check
          %p217 = pneg %p35
        $region14: #{tpu_custom_call.1} parent=11 // pred_check_branch
          %219 = sbr.rel (%p217) target = $region16
        $region15: #{tpu_custom_call.1} parent=11 // pred_region
          _
        $region16: #{tpu_custom_call.1} parent=11 // pred_fallthru
          _
        // Predicated region
        $region17: #{tpu_custom_call.1} parent=11 // pred_check
          %p220 = pneg %p160
        $region18: #{tpu_custom_call.1} parent=11 // pred_check_branch
          %222 = sbr.rel (%p220) target = $region20
        $region19: #{tpu_custom_call.1} parent=11 // pred_region
          _
        $region20: #{tpu_custom_call.1} parent=11 // pred_fallthru
          _
        // Predicated region
        $region21: #{tpu_custom_call.1} parent=11 // pred_check
          %p223 = pneg %p181
        $region22: #{tpu_custom_call.1} parent=11 // pred_check_branch
          %225 = sbr.rel (%p223) target = $region24
        $region23: #{tpu_custom_call.1} parent=11 // pred_region
          _
        $region24: #{tpu_custom_call.1} parent=11 // pred_fallthru
          _
      $region12: #{tpu_custom_call.1} parent=5 // pred_fallthru
        _
      %p226 = scmp.lt.s32.totalorder %s14, 4
      // Predicated region
      $region25: #{tpu_custom_call.1} parent=5 // pred_check
        %p227 = pneg %p226
      $region26: #{tpu_custom_call.1} parent=5 // pred_check_branch
        %229 = sbr.rel (%p227) target = $region28
      $region27: #{tpu_custom_call.1} parent=5 // pred_region
        // Predicated region
        $region29: #{tpu_custom_call.1} parent=27 // pred_check
          %p230 = pneg %p55
        $region30: #{tpu_custom_call.1} parent=27 // pred_check_branch
          %232 = sbr.rel (%p230) target = $region32
        $region31: #{tpu_custom_call.1} parent=27 // pred_region
          %p233 = scmp.lt.s32.totalorder %s14, 3
          %s234 = scalar_select %p233, %s14, 3
          %s235 = smul.addr %s234, 8
          %s236 = scalar_lea.vmem %s1, %s235
        $region32: #{tpu_custom_call.1} parent=27 // pred_fallthru
          _
        // Predicated region
        $region33: #{tpu_custom_call.1} parent=27 // pred_check
          %p237 = pneg %p81
        $region34: #{tpu_custom_call.1} parent=27 // pred_check_branch
          %239 = sbr.rel (%p237) target = $region36
        $region35: #{tpu_custom_call.1} parent=27 // pred_region
          %p240 = scmp.lt.s32.totalorder %s14, 3
          %s241 = scalar_select %p240, %s14, 3
          %s242 = smul.addr %s241, 8
          %s243 = scalar_lea.vmem %s2, %s242
        $region36: #{tpu_custom_call.1} parent=27 // pred_fallthru
          _
        // Predicated region
        $region37: #{tpu_custom_call.1} parent=27 // pred_check
          %p244 = pneg %p107
        $region38: #{tpu_custom_call.1} parent=27 // pred_check_branch
          %246 = sbr.rel (%p244) target = $region40
        $region39: #{tpu_custom_call.1} parent=27 // pred_region
          %p247 = scmp.lt.s32.totalorder %s14, 3
          %s248 = scalar_select %p247, %s14, 3
          %s249 = smul.addr %s248, 8
          %s250 = scalar_lea.vmem %s3, %s249
        $region40: #{tpu_custom_call.1} parent=27 // pred_fallthru
          _
        // Predicated region
        $region41: #{tpu_custom_call.1} parent=27 // pred_check
          %p251 = pneg %p133
        $region42: #{tpu_custom_call.1} parent=27 // pred_check_branch
          %253 = sbr.rel (%p251) target = $region44
        $region43: #{tpu_custom_call.1} parent=27 // pred_region
          %p254 = scmp.lt.s32.totalorder %s14, 3
          %s255 = scalar_select %p254, %s14, 3
          %s256 = smul.addr %s255, 8
          %s257 = scalar_lea.vmem %s4, %s256
        $region44: #{tpu_custom_call.1} parent=27 // pred_fallthru
          _
      $region28: #{tpu_custom_call.1} parent=5 // pred_fallthru
        _
      %p258 = scmp.le.s32.totalorder 1, %s14
      %p259 = scmp.lt.s32.totalorder %s14, 5
      %p260 = pnand %p258, %p259
      %p261 = pneg %p260
      // Predicated region
      $region45: #{tpu_custom_call.1} parent=5 // pred_check
        _
      $region46: #{tpu_custom_call.1} parent=5 // pred_check_branch
        %263 = sbr.rel (%p260) target = $region48
      $region47: #{tpu_custom_call.1} parent=5 // pred_region
        %s264 = ssub.s32 %s14, 1
        %p265 = pneg %p35
        %p266 = pneg %p32
        %p267 = scmp.lt.s32.totalorder %s19, 3
        %s268 = scalar_select %p267, %s19, 3
        %s269 = smul.addr %s268, 8
        %s270 = scalar_lea.vmem %s1, %s269
        %p271 = pneg %p61
        %p272 = pneg %p58
        %p273 = scmp.lt.s32.totalorder %s19, 3
        %s274 = scalar_select %p273, %s19, 3
        %s275 = smul.addr %s274, 8
        %s276 = scalar_lea.vmem %s2, %s275
        %p277 = pneg %p87
        %p278 = pneg %p84
        %p279 = scmp.lt.s32.totalorder %s19, 3
        %s280 = scalar_select %p279, %s19, 3
        %s281 = smul.addr %s280, 8
        %s282 = scalar_lea.vmem %s3, %s281
        %p283 = pneg %p113
        %p284 = pneg %p110
        %p285 = scmp.lt.s32.totalorder %s19, 3
        %s286 = scalar_select %p285, %s19, 3
        %s287 = smul.addr %s286, 8
        %s288 = scalar_lea.vmem %s4, %s287
        %p289 = pneg %p139
        %p290 = pneg %p136
        %p291 = pneg %p160
        %p292 = pneg %p157
        %p293 = pneg %p181
        %p294 = pneg %p178
        %p295 = pneg %p202
        %p296 = pneg %p199
        %p297 = scmp.lt.s32.totalorder %s19, 3
        %s298 = scalar_select %p297, %s19, 3
        %s299 = smul.addr %s298, 8
        %s300 = scalar_lea.vmem %s1, %s299
        %p301 = scmp.lt.s32.totalorder %s19, 3
        %s302 = scalar_select %p301, %s19, 3
        %s303 = smul.addr %s302, 8
        %s304 = scalar_lea.vmem %s2, %s303
        %p305 = scmp.lt.s32.totalorder %s19, 3
        %s306 = scalar_select %p305, %s19, 3
        %s307 = smul.addr %s306, 8
        %s308 = scalar_lea.vmem %s3, %s307
        %p309 = scmp.lt.s32.totalorder %s19, 3
        %s310 = scalar_select %p309, %s19, 3
        %s311 = smul.addr %s310, 8
        %s312 = scalar_lea.vmem %s4, %s311
        %p313 = scmp.eq.s32.totalorder %s19, 0
        // Predicated region
        $region49: #{tpu_custom_call.1} parent=47 // pred_check
          %p314 = pneg %p313
        $region50: #{tpu_custom_call.1} parent=47 // pred_check_branch
          %316 = sbr.rel (%p314) target = $region52
        $region51: #{tpu_custom_call.1} parent=47 // pred_region
          %v317 = vld [vmem:[%s0] sm:$0xff]
          %v318 = vld [vmem:[%s0 + $0x8] sm:$0xff]
          %v319 = vld [vmem:[%s0 + $0x10] sm:$0xff]
          %v320 = vld [vmem:[%s0 + $0x18] sm:$0xff]
          %321 = vst [vmem:[#allocation2] sm:$0xff] %v317
          %322 = vst [vmem:[#allocation2 + $0x8] sm:$0xff] %v318
          %323 = vst [vmem:[#allocation2 + $0x10] sm:$0xff] %v319
          %324 = vst [vmem:[#allocation2 + $0x18] sm:$0xff] %v320
        $region52: #{tpu_custom_call.1} parent=47 // pred_fallthru
          _
        %v325 = vld [vmem:[#allocation2] sm:$0xff]
        %v326 = vld [vmem:[#allocation2 + $0x8] sm:$0xff]
        %v327 = vld [vmem:[#allocation2 + $0x10] sm:$0xff]
        %v328 = vld [vmem:[#allocation2 + $0x18] sm:$0xff]
        %v329 = vld [vmem:[%s5] ss:$8 sm:$0xf]
        %s330 = scalar_lea.vmem %s5, 1
        %v331 = vld [vmem:[%s330] ss:$8 sm:$0xf]
        %s332 = scalar_lea.vmem %s5, 2
        %v333 = vld [vmem:[%s332] ss:$8 sm:$0xf]
        %s334 = scalar_lea.vmem %s5, 3
        %v335 = vld [vmem:[%s334] ss:$8 sm:$0xf]
        %336 = vrot.lane.b32.xlu0 %v325, 17
        %v337 = vpop.permute.xlu0 %336
        %338 = vrot.lane.b32.xlu0 %v326, 17
        %v339 = vpop.permute.xlu0 %338
        %340 = vrot.lane.b32.xlu0 %v327, 17
        %v341 = vpop.permute.xlu0 %340
        %342 = vrot.lane.b32.xlu0 %v328, 17
        %v343 = vpop.permute.xlu0 %342
        %v344 = vlaneseq
        %v345 = vand.u32 %v344, 127
        %vm346 = vcmp.lt.s32.totalorder %v345, 17
        %v347 = vsel %vm346, %v341, %v343
        %v348 = vsel %vm346, %v339, %v341
        %v349 = vsel %vm346, %v337, %v339
        %v350 = vsel %vm346, %v343, %v337
        %v351 = vmul.f32 %v329, %v333
        %v353 = vlaneseq
        %v354 = vshrl.u32 %v353, 7
        %v355 = vsub.s32 0, %v354
        %v356 = vrot.slane %v351, %v355
        %v357 = vlaneseq
        %v358 = vshrl.u32 %v357, 7
        %v359 = vsub.s32 1, %v358
        %v360 = vrot.slane %v351, %v359
        %v361 = vlaneseq
        %v362 = vshrl.u32 %v361, 7
        %v363 = vsub.s32 2, %v362
        %v364 = vrot.slane %v351, %v363
        %v365 = vlaneseq
        %v366 = vshrl.u32 %v365, 7
        %v367 = vsub.s32 3, %v366
        %v368 = vrot.slane %v351, %v367
        %v373 = vmul.f32 %v350, %v356
        %v374 = vmul.f32 %v349, %v360
        %v375 = vmul.f32 %v348, %v364
        %v376 = vmul.f32 %v347, %v368
        %377 = vst [vmem:[#allocation3] sm:$0xff] %v373
        %378 = vst [vmem:[#allocation3 + $0x8] sm:$0xff] %v374
        %379 = vst [vmem:[#allocation3 + $0x10] sm:$0xff] %v375
        %380 = vst [vmem:[#allocation3 + $0x18] sm:$0xff] %v376
        %381 = vrot.lane.b32.xlu0 %v325, 16
        %v382 = vpop.permute.xlu0 %381
        %383 = vrot.lane.b32.xlu0 %v326, 16
        %v384 = vpop.permute.xlu0 %383
        %385 = vrot.lane.b32.xlu0 %v327, 16
        %v386 = vpop.permute.xlu0 %385
        %387 = vrot.lane.b32.xlu0 %v328, 16
        %v388 = vpop.permute.xlu0 %387
        %vm389 = vcmp.lt.s32.totalorder %v345, 16
        %v390 = vsel %vm389, %v386, %v388
        %v391 = vsel %vm389, %v384, %v386
        %v392 = vsel %vm389, %v382, %v384
        %v393 = vsel %vm389, %v388, %v382
        %v395 = vlaneseq
        %v396 = vshrl.u32 %v395, 7
        %v397 = vsub.s32 0, %v396
        %v398 = vrot.slane %v329, %v397
        %v399 = vlaneseq
        %v400 = vshrl.u32 %v399, 7
        %v401 = vsub.s32 1, %v400
        %v402 = vrot.slane %v329, %v401
        %v403 = vlaneseq
        %v404 = vshrl.u32 %v403, 7
        %v405 = vsub.s32 2, %v404
        %v406 = vrot.slane %v329, %v405
        %v407 = vlaneseq
        %v408 = vshrl.u32 %v407, 7
        %v409 = vsub.s32 3, %v408
        %v410 = vrot.slane %v329, %v409
        %v415 = vmul.f32 %v393, %v398
        %v416 = vmul.f32 %v392, %v402
        %v417 = vmul.f32 %v391, %v406
        %v418 = vmul.f32 %v390, %v410
        %419 = vst [vmem:[#allocation3 + $0x20] sm:$0xff] %v415
        %420 = vst [vmem:[#allocation3 + $0x28] sm:$0xff] %v416
        %421 = vst [vmem:[#allocation3 + $0x30] sm:$0xff] %v417
        %422 = vst [vmem:[#allocation3 + $0x38] sm:$0xff] %v418
        %423 = vrot.lane.b32.xlu0 %v325, 15
        %v424 = vpop.permute.xlu0 %423
        %425 = vrot.lane.b32.xlu0 %v326, 15
        %v426 = vpop.permute.xlu0 %425
        %427 = vrot.lane.b32.xlu0 %v327, 15
        %v428 = vpop.permute.xlu0 %427
        %429 = vrot.lane.b32.xlu0 %v328, 15
        %v430 = vpop.permute.xlu0 %429
        %vm431 = vcmp.lt.s32.totalorder %v345, 15
        %v432 = vsel %vm431, %v428, %v430
        %v433 = vsel %vm431, %v426, %v428
        %v434 = vsel %vm431, %v424, %v426
        %v435 = vsel %vm431, %v430, %v424
        %v436 = vmul.f32 %v329, %v335
        %v438 = vlaneseq
        %v439 = vshrl.u32 %v438, 7
        %v440 = vsub.s32 0, %v439
        %v441 = vrot.slane %v436, %v440
        %v442 = vlaneseq
        %v443 = vshrl.u32 %v442, 7
        %v444 = vsub.s32 1, %v443
        %v445 = vrot.slane %v436, %v444
        %v446 = vlaneseq
        %v447 = vshrl.u32 %v446, 7
        %v448 = vsub.s32 2, %v447
        %v449 = vrot.slane %v436, %v448
        %v450 = vlaneseq
        %v451 = vshrl.u32 %v450, 7
        %v452 = vsub.s32 3, %v451
        %v453 = vrot.slane %v436, %v452
        %v458 = vmul.f32 %v435, %v441
        %v459 = vmul.f32 %v434, %v445
        %v460 = vmul.f32 %v433, %v449
        %v461 = vmul.f32 %v432, %v453
        %462 = vst [vmem:[#allocation3 + $0x40] sm:$0xff] %v458
        %463 = vst [vmem:[#allocation3 + $0x48] sm:$0xff] %v459
        %464 = vst [vmem:[#allocation3 + $0x50] sm:$0xff] %v460
        %465 = vst [vmem:[#allocation3 + $0x58] sm:$0xff] %v461
        %466 = vrot.lane.b32.xlu0 %v325, 1
        %v467 = vpop.permute.xlu0 %466
        %468 = vrot.lane.b32.xlu0 %v326, 1
        %v469 = vpop.permute.xlu0 %468
        %470 = vrot.lane.b32.xlu0 %v327, 1
        %v471 = vpop.permute.xlu0 %470
        %472 = vrot.lane.b32.xlu0 %v328, 1
        %v473 = vpop.permute.xlu0 %472
        %vm474 = vcmp.lt.s32.totalorder %v345, 1
        %v475 = vsel %vm474, %v471, %v473
        %v476 = vsel %vm474, %v469, %v471
        %v477 = vsel %vm474, %v467, %v469
        %v478 = vsel %vm474, %v473, %v467
        %v480 = vlaneseq
        %v481 = vshrl.u32 %v480, 7
        %v482 = vsub.s32 0, %v481
        %v483 = vrot.slane %v333, %v482
        %v484 = vlaneseq
        %v485 = vshrl.u32 %v484, 7
        %v486 = vsub.s32 1, %v485
        %v487 = vrot.slane %v333, %v486
        %v488 = vlaneseq
        %v489 = vshrl.u32 %v488, 7
        %v490 = vsub.s32 2, %v489
        %v491 = vrot.slane %v333, %v490
        %v492 = vlaneseq
        %v493 = vshrl.u32 %v492, 7
        %v494 = vsub.s32 3, %v493
        %v495 = vrot.slane %v333, %v494
        %v500 = vmul.f32 %v478, %v483
        %v501 = vmul.f32 %v477, %v487
        %v502 = vmul.f32 %v476, %v491
        %v503 = vmul.f32 %v475, %v495
        %504 = vst [vmem:[#allocation3 + $0x60] sm:$0xff] %v500
        %505 = vst [vmem:[#allocation3 + $0x68] sm:$0xff] %v501
        %506 = vst [vmem:[#allocation3 + $0x70] sm:$0xff] %v502
        %507 = vst [vmem:[#allocation3 + $0x78] sm:$0xff] %v503
        %508 = vst [vmem:[#allocation3 + $0x80] sm:$0xff] %v325
        %509 = vst [vmem:[#allocation3 + $0x88] sm:$0xff] %v326
        %510 = vst [vmem:[#allocation3 + $0x90] sm:$0xff] %v327
        %511 = vst [vmem:[#allocation3 + $0x98] sm:$0xff] %v328
        %512 = vrot.lane.b32.xlu0 %v325, 127
        %v513 = vpop.permute.xlu0 %512
        %514 = vrot.lane.b32.xlu0 %v326, 127
        %v515 = vpop.permute.xlu0 %514
        %516 = vrot.lane.b32.xlu0 %v327, 127
        %v517 = vpop.permute.xlu0 %516
        %518 = vrot.lane.b32.xlu0 %v328, 127
        %v519 = vpop.permute.xlu0 %518
        %vm520 = vcmp.lt.s32.totalorder %v345, 127
        %v521 = vsel %vm520, %v517, %v519
        %v522 = vsel %vm520, %v515, %v517
        %v523 = vsel %vm520, %v513, %v515
        %v524 = vsel %vm520, %v519, %v513
        %v526 = vlaneseq
        %v527 = vshrl.u32 %v526, 7
        %v528 = vsub.s32 0, %v527
        %v529 = vrot.slane %v335, %v528
        %v530 = vlaneseq
        %v531 = vshrl.u32 %v530, 7
        %v532 = vsub.s32 1, %v531
        %v533 = vrot.slane %v335, %v532
        %v534 = vlaneseq
        %v535 = vshrl.u32 %v534, 7
        %v536 = vsub.s32 2, %v535
        %v537 = vrot.slane %v335, %v536
        %v538 = vlaneseq
        %v539 = vshrl.u32 %v538, 7
        %v540 = vsub.s32 3, %v539
        %v541 = vrot.slane %v335, %v540
        %v546 = vmul.f32 %v523, %v529
        %v547 = vmul.f32 %v522, %v533
        %v548 = vmul.f32 %v521, %v537
        %v549 = vmul.f32 %v524, %v541
        %550 = vst [vmem:[#allocation3 + $0xa0] sm:$0xff] %v546
        %551 = vst [vmem:[#allocation3 + $0xa8] sm:$0xff] %v547
        %552 = vst [vmem:[#allocation3 + $0xb0] sm:$0xff] %v548
        %553 = vst [vmem:[#allocation3 + $0xb8] sm:$0xff] %v549
        %554 = vrot.lane.b32.xlu0 %v325, 113
        %v555 = vpop.permute.xlu0 %554
        %556 = vrot.lane.b32.xlu0 %v326, 113
        %v557 = vpop.permute.xlu0 %556
        %558 = vrot.lane.b32.xlu0 %v327, 113
        %v559 = vpop.permute.xlu0 %558
        %560 = vrot.lane.b32.xlu0 %v328, 113
        %v561 = vpop.permute.xlu0 %560
        %vm562 = vcmp.lt.s32.totalorder %v345, 113
        %v563 = vsel %vm562, %v559, %v561
        %v564 = vsel %vm562, %v557, %v559
        %v565 = vsel %vm562, %v555, %v557
        %v566 = vsel %vm562, %v561, %v555
        %v567 = vmul.f32 %v331, %v333
        %v569 = vlaneseq
        %v570 = vshrl.u32 %v569, 7
        %v571 = vsub.s32 0, %v570
        %v572 = vrot.slane %v567, %v571
        %v573 = vlaneseq
        %v574 = vshrl.u32 %v573, 7
        %v575 = vsub.s32 1, %v574
        %v576 = vrot.slane %v567, %v575
        %v577 = vlaneseq
        %v578 = vshrl.u32 %v577, 7
        %v579 = vsub.s32 2, %v578
        %v580 = vrot.slane %v567, %v579
        %v581 = vlaneseq
        %v582 = vshrl.u32 %v581, 7
        %v583 = vsub.s32 3, %v582
        %v584 = vrot.slane %v567, %v583
        %v589 = vmul.f32 %v565, %v572
        %v590 = vmul.f32 %v564, %v576
        %v591 = vmul.f32 %v563, %v580
        %v592 = vmul.f32 %v566, %v584
        %593 = vst [vmem:[#allocation3 + $0xc0] sm:$0xff] %v589
        %594 = vst [vmem:[#allocation3 + $0xc8] sm:$0xff] %v590
        %595 = vst [vmem:[#allocation3 + $0xd0] sm:$0xff] %v591
        %596 = vst [vmem:[#allocation3 + $0xd8] sm:$0xff] %v592
        %597 = vrot.lane.b32.xlu0 %v325, 112
        %v598 = vpop.permute.xlu0 %597
        %599 = vrot.lane.b32.xlu0 %v326, 112
        %v600 = vpop.permute.xlu0 %599
        %601 = vrot.lane.b32.xlu0 %v327, 112
        %v602 = vpop.permute.xlu0 %601
        %603 = vrot.lane.b32.xlu0 %v328, 112
        %v604 = vpop.permute.xlu0 %603
        %vm605 = vcmp.lt.s32.totalorder %v345, 112
        %v606 = vsel %vm605, %v602, %v604
        %v607 = vsel %vm605, %v600, %v602
        %v608 = vsel %vm605, %v598, %v600
        %v609 = vsel %vm605, %v604, %v598
        %v611 = vlaneseq
        %v612 = vshrl.u32 %v611, 7
        %v613 = vsub.s32 0, %v612
        %v614 = vrot.slane %v331, %v613
        %v615 = vlaneseq
        %v616 = vshrl.u32 %v615, 7
        %v617 = vsub.s32 1, %v616
        %v618 = vrot.slane %v331, %v617
        %v619 = vlaneseq
        %v620 = vshrl.u32 %v619, 7
        %v621 = vsub.s32 2, %v620
        %v622 = vrot.slane %v331, %v621
        %v623 = vlaneseq
        %v624 = vshrl.u32 %v623, 7
        %v625 = vsub.s32 3, %v624
        %v626 = vrot.slane %v331, %v625
        %v631 = vmul.f32 %v608, %v614
        %v632 = vmul.f32 %v607, %v618
        %v633 = vmul.f32 %v606, %v622
        %v634 = vmul.f32 %v609, %v626
        %635 = vst [vmem:[#allocation3 + $0xe0] sm:$0xff] %v631
        %636 = vst [vmem:[#allocation3 + $0xe8] sm:$0xff] %v632
        %637 = vst [vmem:[#allocation3 + $0xf0] sm:$0xff] %v633
        %638 = vst [vmem:[#allocation3 + $0xf8] sm:$0xff] %v634
        %639 = vrot.lane.b32.xlu0 %v325, 111
        %v640 = vpop.permute.xlu0 %639
        %641 = vrot.lane.b32.xlu0 %v326, 111
        %v642 = vpop.permute.xlu0 %641
        %643 = vrot.lane.b32.xlu0 %v327, 111
        %v644 = vpop.permute.xlu0 %643
        %645 = vrot.lane.b32.xlu0 %v328, 111
        %v646 = vpop.permute.xlu0 %645
        %vm647 = vcmp.lt.s32.totalorder %v345, 111
        %v648 = vsel %vm647, %v644, %v646
        %v649 = vsel %vm647, %v642, %v644
        %v650 = vsel %vm647, %v640, %v642
        %v651 = vsel %vm647, %v646, %v640
        %v652 = vmul.f32 %v331, %v335
        %v654 = vlaneseq
        %v655 = vshrl.u32 %v654, 7
        %v656 = vsub.s32 0, %v655
        %v657 = vrot.slane %v652, %v656
        %v658 = vlaneseq
        %v659 = vshrl.u32 %v658, 7
        %v660 = vsub.s32 1, %v659
        %v661 = vrot.slane %v652, %v660
        %v662 = vlaneseq
        %v663 = vshrl.u32 %v662, 7
        %v664 = vsub.s32 2, %v663
        %v665 = vrot.slane %v652, %v664
        %v666 = vlaneseq
        %v667 = vshrl.u32 %v666, 7
        %v668 = vsub.s32 3, %v667
        %v669 = vrot.slane %v652, %v668
        %v674 = vmul.f32 %v650, %v657
        %v675 = vmul.f32 %v649, %v661
        %v676 = vmul.f32 %v648, %v665
        %v677 = vmul.f32 %v651, %v669
        %678 = vst [vmem:[#allocation3 + $0x100] sm:$0xff] %v674
        %679 = vst [vmem:[#allocation3 + $0x108] sm:$0xff] %v675
        %680 = vst [vmem:[#allocation3 + $0x110] sm:$0xff] %v676
        %681 = vst [vmem:[#allocation3 + $0x118] sm:$0xff] %v677
        %v682 = vld [vmem:[%s300] sm:$0xff]
        %v683 = vld [vmem:[#allocation3] sm:$0xff]
        %v684 = vld [vmem:[#allocation3 + $0x8] sm:$0xff]
        %v685 = vld [vmem:[#allocation3 + $0x10] sm:$0xff]
        %v686 = vld [vmem:[#allocation3 + $0x18] sm:$0xff]
        %v687 = vld [vmem:[#allocation3 + $0x20] sm:$0xff]
        %v688 = vld [vmem:[#allocation3 + $0x28] sm:$0xff]
        %v689 = vld [vmem:[#allocation3 + $0x30] sm:$0xff]
        %v690 = vld [vmem:[#allocation3 + $0x38] sm:$0xff]
        %v691 = vld [vmem:[#allocation3 + $0x40] sm:$0xff]
        %v692 = vld [vmem:[#allocation3 + $0x48] sm:$0xff]
        %v693 = vld [vmem:[#allocation3 + $0x50] sm:$0xff]
        %v694 = vld [vmem:[#allocation3 + $0x58] sm:$0xff]
        %v695 = vld [vmem:[#allocation3 + $0x60] sm:$0xff]
        %v696 = vld [vmem:[#allocation3 + $0x68] sm:$0xff]
        %v697 = vld [vmem:[#allocation3 + $0x70] sm:$0xff]
        %v698 = vld [vmem:[#allocation3 + $0x78] sm:$0xff]
        %v699 = vld [vmem:[#allocation3 + $0x80] sm:$0xff]
        %v700 = vld [vmem:[#allocation3 + $0x88] sm:$0xff]
        %v701 = vld [vmem:[#allocation3 + $0x90] sm:$0xff]
        %v702 = vld [vmem:[#allocation3 + $0x98] sm:$0xff]
        %v703 = vld [vmem:[#allocation3 + $0xa0] sm:$0xff]
        %v704 = vld [vmem:[#allocation3 + $0xa8] sm:$0xff]
        %v705 = vld [vmem:[#allocation3 + $0xb0] sm:$0xff]
        %v706 = vld [vmem:[#allocation3 + $0xb8] sm:$0xff]
        %v707 = vld [vmem:[#allocation3 + $0xc0] sm:$0xff]
        %v708 = vld [vmem:[#allocation3 + $0xc8] sm:$0xff]
        %v709 = vld [vmem:[#allocation3 + $0xd0] sm:$0xff]
        %v710 = vld [vmem:[#allocation3 + $0xd8] sm:$0xff]
        %v711 = vld [vmem:[#allocation3 + $0xe0] sm:$0xff]
        %v712 = vld [vmem:[#allocation3 + $0xe8] sm:$0xff]
        %v713 = vld [vmem:[#allocation3 + $0xf0] sm:$0xff]
        %v714 = vld [vmem:[#allocation3 + $0xf8] sm:$0xff]
        %v715 = vld [vmem:[#allocation3 + $0x100] sm:$0xff]
        %v716 = vld [vmem:[#allocation3 + $0x108] sm:$0xff]
        %v717 = vld [vmem:[#allocation3 + $0x110] sm:$0xff]
        %v718 = vld [vmem:[#allocation3 + $0x118] sm:$0xff]
        %v719 = vld [vmem:[%s304] sm:$0xff]
        %721 = vset.pattern.permute.xlu0 0
        %722 = vperm.xlu0 %721, %v719
        %v723 = vpop.permute.xlu0 %722
        %vm725 = vcmask 588800
        %v727 = vsel %vm725, %v682, 0
        %729 = vmatprep.subr.mxu0 0.0
        %730 = vmatpush1.msra.mxu0 0.0
        %731 = vmatprep.subr.mxu0 0.0
        %732 = vmatpush1.msra.mxu0 0.0
        %733 = vmatprep.subr.mxu0 0.0
        %734 = vmatpush1.msra.mxu0 0.0
        %735 = vmatprep.subr.mxu0 0.0
        %736 = vmatpush1.msra.mxu0 0.0
        %737 = vmatprep.subr.mxu0 0.0
        %738 = vmatpush1.msra.mxu0 0.0
        %739 = vmatprep.subr.mxu0 0.0
        %740 = vmatpush1.msra.mxu0 0.0
        %741 = vmatprep.subr.mxu0 0.0
        %742 = vmatpush1.msra.mxu0 0.0
        %743 = vmatprep.subr.mxu0 %v716
        %744 = vmatpush1.msra.mxu0 %v715
        %745 = vmatprep.subr.mxu0 %v712
        %746 = vmatpush1.msra.mxu0 %v711
        %747 = vmatprep.subr.mxu0 %v708
        %748 = vmatpush1.msra.mxu0 %v707
        %749 = vmatprep.subr.mxu0 %v704
        %750 = vmatpush1.msra.mxu0 %v703
        %751 = vmatprep.subr.mxu0 %v700
        %752 = vmatpush1.msra.mxu0 %v699
        %753 = vmatprep.subr.mxu0 %v696
        %754 = vmatpush1.msra.mxu0 %v695
        %755 = vmatprep.subr.mxu0 %v692
        %756 = vmatpush1.msra.mxu0 %v691
        %757 = vmatprep.subr.mxu0 %v688
        %758 = vmatpush1.msra.mxu0 %v687
        %759 = vmatprep.subr.mxu0 %v684
        %760 = vmatpush1.msra.mxu0 %v683
        %761 = vmatprep.subr.mxu0 0.0
        %762 = vmatpush2.msra.mxu0 0.0
        %763 = vmatprep.subr.mxu0 0.0
        %764 = vmatpush2.msra.mxu0 0.0
        %765 = vmatprep.subr.mxu0 0.0
        %766 = vmatpush2.msra.mxu0 0.0
        %767 = vmatprep.subr.mxu0 0.0
        %768 = vmatpush2.msra.mxu0 0.0
        %769 = vmatprep.subr.mxu0 0.0
        %770 = vmatpush2.msra.mxu0 0.0
        %771 = vmatprep.subr.mxu0 0.0
        %772 = vmatpush2.msra.mxu0 0.0
        %773 = vmatprep.subr.mxu0 0.0
        %774 = vmatpush2.msra.mxu0 0.0
        %775 = vmatprep.subr.mxu0 0.0
        %776 = vmatpush2.msra.mxu0 0.0
        %777 = vmatprep.subr.mxu0 0.0
        %778 = vmatpush2.msra.mxu0 0.0
        %779 = vmatprep.subr.mxu0 0.0
        %780 = vmatpush2.msra.mxu0 0.0
        %781 = vmatprep.subr.mxu0 0.0
        %782 = vmatpush2.msra.mxu0 0.0
        %783 = vmatprep.subr.mxu0 0.0
        %784 = vmatpush2.msra.mxu0 0.0
        %785 = vmatprep.subr.mxu0 0.0
        %786 = vmatpush2.msra.mxu0 0.0
        %787 = vmatprep.subr.mxu0 0.0
        %788 = vmatpush2.msra.mxu0 0.0
        %789 = vmatprep.subr.mxu0 0.0
        %790 = vmatpush2.msra.mxu0 0.0
        %791 = vmatprep.subr.mxu0 0.0
        %792 = vmatpush2.msra.mxu0 0.0
        %793 = vmatprep.mubr.f32.mxu0 0.0
        %794 = vmatmul.mubr.f32.gmra.mxu0 %v727
        %v795 = vpop.f32.mrf.mxu0
        %v796 = vadd.f32 %v723, %v795
        %v797 = vpop.f32.mrf.mxu0
        %v798 = vadd.f32 %v723, %v797
        %799 = vdwg.mxu0
        %800 = vmatprep.subr.mxu0 0.0
        %801 = vmatpush1.msra.mxu0 0.0
        %802 = vmatprep.subr.mxu0 0.0
        %803 = vmatpush1.msra.mxu0 0.0
        %804 = vmatprep.subr.mxu0 0.0
        %805 = vmatpush1.msra.mxu0 0.0
        %806 = vmatprep.subr.mxu0 0.0
        %807 = vmatpush1.msra.mxu0 0.0
        %808 = vmatprep.subr.mxu0 0.0
        %809 = vmatpush1.msra.mxu0 0.0
        %810 = vmatprep.subr.mxu0 0.0
        %811 = vmatpush1.msra.mxu0 0.0
        %812 = vmatprep.subr.mxu0 0.0
        %813 = vmatpush1.msra.mxu0 0.0
        %814 = vmatprep.subr.mxu0 %v718
        %815 = vmatpush1.msra.mxu0 %v717
        %816 = vmatprep.subr.mxu0 %v714
        %817 = vmatpush1.msra.mxu0 %v713
        %818 = vmatprep.subr.mxu0 %v710
        %819 = vmatpush1.msra.mxu0 %v709
        %820 = vmatprep.subr.mxu0 %v706
        %821 = vmatpush1.msra.mxu0 %v705
        %822 = vmatprep.subr.mxu0 %v702
        %823 = vmatpush1.msra.mxu0 %v701
        %824 = vmatprep.subr.mxu0 %v698
        %825 = vmatpush1.msra.mxu0 %v697
        %826 = vmatprep.subr.mxu0 %v694
        %827 = vmatpush1.msra.mxu0 %v693
        %828 = vmatprep.subr.mxu0 %v690
        %829 = vmatpush1.msra.mxu0 %v689
        %830 = vmatprep.subr.mxu0 %v686
        %831 = vmatpush1.msra.mxu0 %v685
        %832 = vmatprep.subr.mxu0 0.0
        %833 = vmatpush2.msra.mxu0 0.0
        %834 = vmatprep.subr.mxu0 0.0
        %835 = vmatpush2.msra.mxu0 0.0
        %836 = vmatprep.subr.mxu0 0.0
        %837 = vmatpush2.msra.mxu0 0.0
        %838 = vmatprep.subr.mxu0 0.0
        %839 = vmatpush2.msra.mxu0 0.0
        %840 = vmatprep.subr.mxu0 0.0
        %841 = vmatpush2.msra.mxu0 0.0
        %842 = vmatprep.subr.mxu0 0.0
        %843 = vmatpush2.msra.mxu0 0.0
        %844 = vmatprep.subr.mxu0 0.0
        %845 = vmatpush2.msra.mxu0 0.0
        %846 = vmatprep.subr.mxu0 0.0
        %847 = vmatpush2.msra.mxu0 0.0
        %848 = vmatprep.subr.mxu0 0.0
        %849 = vmatpush2.msra.mxu0 0.0
        %850 = vmatprep.subr.mxu0 0.0
        %851 = vmatpush2.msra.mxu0 0.0
        %852 = vmatprep.subr.mxu0 0.0
        %853 = vmatpush2.msra.mxu0 0.0
        %854 = vmatprep.subr.mxu0 0.0
        %855 = vmatpush2.msra.mxu0 0.0
        %856 = vmatprep.subr.mxu0 0.0
        %857 = vmatpush2.msra.mxu0 0.0
        %858 = vmatprep.subr.mxu0 0.0
        %859 = vmatpush2.msra.mxu0 0.0
        %860 = vmatprep.subr.mxu0 0.0
        %861 = vmatpush2.msra.mxu0 0.0
        %862 = vmatprep.subr.mxu0 0.0
        %863 = vmatpush2.msra.mxu0 0.0
        %864 = vmatprep.mubr.f32.mxu0 0.0
        %865 = vmatmul.mubr.f32.gmra.mxu0 %v727
        %v866 = vpop.f32.mrf.mxu0
        %v867 = vadd.f32 %v723, %v866
        %v868 = vpop.f32.mrf.mxu0
        %v869 = vadd.f32 %v723, %v868
        %870 = vdwg.mxu0
        %v871 = vmax.f32 %v796, 0.0
        %v872 = vmax.f32 %v798, 0.0
        %v873 = vmax.f32 %v867, 0.0
        %v874 = vmax.f32 %v869, 0.0
        %v875 = vld [vmem:[%s6] sm:$0xff]
        %v876 = vld [vmem:[%s6 + $0x8] sm:$0xff]
        %v877 = vld [vmem:[%s6 + $0x10] sm:$0xff]
        %v878 = vld [vmem:[%s6 + $0x18] sm:$0xff]
        %v879 = vld [vmem:[%s6 + $0x20] sm:$0xff]
        %v880 = vld [vmem:[%s6 + $0x28] sm:$0xff]
        %v881 = vld [vmem:[%s6 + $0x30] sm:$0xff]
        %v882 = vld [vmem:[%s6 + $0x38] sm:$0xff]
        %v883 = vld [vmem:[%s6 + $0x40] sm:$0xff]
        %v884 = vld [vmem:[%s6 + $0x48] sm:$0xff]
        %v885 = vld [vmem:[%s6 + $0x50] sm:$0xff]
        %v886 = vld [vmem:[%s6 + $0x58] sm:$0xff]
        %v887 = vld [vmem:[%s6 + $0x60] sm:$0xff]
        %v888 = vld [vmem:[%s6 + $0x68] sm:$0xff]
        %v889 = vld [vmem:[%s6 + $0x70] sm:$0xff]
        %v890 = vld [vmem:[%s6 + $0x78] sm:$0xff]
        %v891 = vld [vmem:[%s6 + $0x80] sm:$0xff]
        %v892 = vld [vmem:[%s6 + $0x88] sm:$0xff]
        %v893 = vld [vmem:[%s6 + $0x90] sm:$0xff]
        %v894 = vld [vmem:[%s6 + $0x98] sm:$0xff]
        %v895 = vld [vmem:[%s6 + $0xa0] sm:$0xff]
        %v896 = vld [vmem:[%s6 + $0xa8] sm:$0xff]
        %v897 = vld [vmem:[%s6 + $0xb0] sm:$0xff]
        %v898 = vld [vmem:[%s6 + $0xb8] sm:$0xff]
        %v899 = vld [vmem:[%s6 + $0xc0] sm:$0xff]
        %v900 = vld [vmem:[%s6 + $0xc8] sm:$0xff]
        %v901 = vld [vmem:[%s6 + $0xd0] sm:$0xff]
        %v902 = vld [vmem:[%s6 + $0xd8] sm:$0xff]
        %v903 = vld [vmem:[%s6 + $0xe0] sm:$0xff]
        %v904 = vld [vmem:[%s6 + $0xe8] sm:$0xff]
        %v905 = vld [vmem:[%s6 + $0xf0] sm:$0xff]
        %v906 = vld [vmem:[%s6 + $0xf8] sm:$0xff]
        %v907 = vld [vmem:[%s6 + $0x100] sm:$0xff]
        %v908 = vld [vmem:[%s6 + $0x108] sm:$0xff]
        %v909 = vld [vmem:[%s6 + $0x110] sm:$0xff]
        %v910 = vld [vmem:[%s6 + $0x118] sm:$0xff]
        %v911 = vld [vmem:[%s6 + $0x120] sm:$0xff]
        %v912 = vld [vmem:[%s6 + $0x128] sm:$0xff]
        %v913 = vld [vmem:[%s6 + $0x130] sm:$0xff]
        %v914 = vld [vmem:[%s6 + $0x138] sm:$0xff]
        %v915 = vld [vmem:[%s6 + $0x140] sm:$0xff]
        %v916 = vld [vmem:[%s6 + $0x148] sm:$0xff]
        %v917 = vld [vmem:[%s6 + $0x150] sm:$0xff]
        %v918 = vld [vmem:[%s6 + $0x158] sm:$0xff]
        %v919 = vld [vmem:[%s6 + $0x160] sm:$0xff]
        %v920 = vld [vmem:[%s6 + $0x168] sm:$0xff]
        %v921 = vld [vmem:[%s6 + $0x170] sm:$0xff]
        %v922 = vld [vmem:[%s6 + $0x178] sm:$0xff]
        %v923 = vld [vmem:[%s6 + $0x180] sm:$0xff]
        %v924 = vld [vmem:[%s6 + $0x188] sm:$0xff]
        %v925 = vld [vmem:[%s6 + $0x190] sm:$0xff]
        %v926 = vld [vmem:[%s6 + $0x198] sm:$0xff]
        %v927 = vld [vmem:[%s6 + $0x1a0] sm:$0xff]
        %v928 = vld [vmem:[%s6 + $0x1a8] sm:$0xff]
        %v929 = vld [vmem:[%s6 + $0x1b0] sm:$0xff]
        %v930 = vld [vmem:[%s6 + $0x1b8] sm:$0xff]
        %v931 = vld [vmem:[%s6 + $0x1c0] sm:$0xff]
        %v932 = vld [vmem:[%s6 + $0x1c8] sm:$0xff]
        %v933 = vld [vmem:[%s6 + $0x1d0] sm:$0xff]
        %v934 = vld [vmem:[%s6 + $0x1d8] sm:$0xff]
        %v935 = vld [vmem:[%s6 + $0x1e0] sm:$0xff]
        %v936 = vld [vmem:[%s6 + $0x1e8] sm:$0xff]
        %v937 = vld [vmem:[%s6 + $0x1f0] sm:$0xff]
        %v938 = vld [vmem:[%s6 + $0x1f8] sm:$0xff]
        %939 = vmatprep.subr.mxu0 0.0
        %940 = vmatpush1.msra.mxu0 %v890
        %941 = vmatprep.subr.mxu0 0.0
        %942 = vmatpush1.msra.mxu0 %v889
        %943 = vmatprep.subr.mxu0 0.0
        %944 = vmatpush1.msra.mxu0 %v888
        %945 = vmatprep.subr.mxu0 0.0
        %946 = vmatpush1.msra.mxu0 %v887
        %947 = vmatprep.subr.mxu0 0.0
        %948 = vmatpush1.msra.mxu0 %v886
        %949 = vmatprep.subr.mxu0 0.0
        %950 = vmatpush1.msra.mxu0 %v885
        %951 = vmatprep.subr.mxu0 0.0
        %952 = vmatpush1.msra.mxu0 %v884
        %953 = vmatprep.subr.mxu0 0.0
        %954 = vmatpush1.msra.mxu0 %v883
        %955 = vmatprep.subr.mxu0 0.0
        %956 = vmatpush1.msra.mxu0 %v882
        %957 = vmatprep.subr.mxu0 0.0
        %958 = vmatpush1.msra.mxu0 %v881
        %959 = vmatprep.subr.mxu0 0.0
        %960 = vmatpush1.msra.mxu0 %v880
        %961 = vmatprep.subr.mxu0 0.0
        %962 = vmatpush1.msra.mxu0 %v879
        %963 = vmatprep.subr.mxu0 0.0
        %964 = vmatpush1.msra.mxu0 %v878
        %965 = vmatprep.subr.mxu0 0.0
        %966 = vmatpush1.msra.mxu0 %v877
        %967 = vmatprep.subr.mxu0 0.0
        %968 = vmatpush1.msra.mxu0 %v876
        %969 = vmatprep.subr.mxu0 0.0
        %970 = vmatpush1.msra.mxu0 %v875
        %971 = vmatprep.subr.mxu0 0.0
        %972 = vmatpush2.msra.mxu0 %v906
        %973 = vmatprep.subr.mxu0 0.0
        %974 = vmatpush2.msra.mxu0 %v905
        %975 = vmatprep.subr.mxu0 0.0
        %976 = vmatpush2.msra.mxu0 %v904
        %977 = vmatprep.subr.mxu0 0.0
        %978 = vmatpush2.msra.mxu0 %v903
        %979 = vmatprep.subr.mxu0 0.0
        %980 = vmatpush2.msra.mxu0 %v902
        %981 = vmatprep.subr.mxu0 0.0
        %982 = vmatpush2.msra.mxu0 %v901
        %983 = vmatprep.subr.mxu0 0.0
        %984 = vmatpush2.msra.mxu0 %v900
        %985 = vmatprep.subr.mxu0 0.0
        %986 = vmatpush2.msra.mxu0 %v899
        %987 = vmatprep.subr.mxu0 0.0
        %988 = vmatpush2.msra.mxu0 %v898
        %989 = vmatprep.subr.mxu0 0.0
        %990 = vmatpush2.msra.mxu0 %v897
        %991 = vmatprep.subr.mxu0 0.0
        %992 = vmatpush2.msra.mxu0 %v896
        %993 = vmatprep.subr.mxu0 0.0
        %994 = vmatpush2.msra.mxu0 %v895
        %995 = vmatprep.subr.mxu0 0.0
        %996 = vmatpush2.msra.mxu0 %v894
        %997 = vmatprep.subr.mxu0 0.0
        %998 = vmatpush2.msra.mxu0 %v893
        %999 = vmatprep.subr.mxu0 0.0
        %1000 = vmatpush2.msra.mxu0 %v892
        %1001 = vmatprep.subr.mxu0 0.0
        %1002 = vmatpush2.msra.mxu0 %v891
        %1003 = vmatprep.mubr.f32.mxu0 %v872
        %1004 = vmatmul.mubr.f32.gmra.mxu0 %v871
        %v1005 = vpop.f32.mrf.mxu0
        %v1006 = vadd.f32 0.0, %v1005
        %v1007 = vpop.f32.mrf.mxu0
        %1008 = vdwg.mxu0
        %1009 = vmatprep.subr.mxu0 0.0
        %1010 = vmatpush1.msra.mxu0 %v922
        %1011 = vmatprep.subr.mxu0 0.0
        %1012 = vmatpush1.msra.mxu0 %v921
        %1013 = vmatprep.subr.mxu0 0.0
        %1014 = vmatpush1.msra.mxu0 %v920
        %1015 = vmatprep.subr.mxu0 0.0
        %1016 = vmatpush1.msra.mxu0 %v919
        %1017 = vmatprep.subr.mxu0 0.0
        %1018 = vmatpush1.msra.mxu0 %v918
        %1019 = vmatprep.subr.mxu0 0.0
        %1020 = vmatpush1.msra.mxu0 %v917
        %1021 = vmatprep.subr.mxu0 0.0
        %1022 = vmatpush1.msra.mxu0 %v916
        %1023 = vmatprep.subr.mxu0 0.0
        %1024 = vmatpush1.msra.mxu0 %v915
        %1025 = vmatprep.subr.mxu0 0.0
        %1026 = vmatpush1.msra.mxu0 %v914
        %1027 = vmatprep.subr.mxu0 0.0
        %1028 = vmatpush1.msra.mxu0 %v913
        %1029 = vmatprep.subr.mxu0 0.0
        %1030 = vmatpush1.msra.mxu0 %v912
        %1031 = vmatprep.subr.mxu0 0.0
        %1032 = vmatpush1.msra.mxu0 %v911
        %1033 = vmatprep.subr.mxu0 0.0
        %1034 = vmatpush1.msra.mxu0 %v910
        %1035 = vmatprep.subr.mxu0 0.0
        %1036 = vmatpush1.msra.mxu0 %v909
        %1037 = vmatprep.subr.mxu0 0.0
        %1038 = vmatpush1.msra.mxu0 %v908
        %1039 = vmatprep.subr.mxu0 0.0
        %1040 = vmatpush1.msra.mxu0 %v907
        %1041 = vmatprep.subr.mxu0 0.0
        %1042 = vmatpush2.msra.mxu0 %v938
        %1043 = vmatprep.subr.mxu0 0.0
        %1044 = vmatpush2.msra.mxu0 %v937
        %1045 = vmatprep.subr.mxu0 0.0
        %1046 = vmatpush2.msra.mxu0 %v936
        %1047 = vmatprep.subr.mxu0 0.0
        %1048 = vmatpush2.msra.mxu0 %v935
        %1049 = vmatprep.subr.mxu0 0.0
        %1050 = vmatpush2.msra.mxu0 %v934
        %1051 = vmatprep.subr.mxu0 0.0
        %1052 = vmatpush2.msra.mxu0 %v933
        %1053 = vmatprep.subr.mxu0 0.0
        %1054 = vmatpush2.msra.mxu0 %v932
        %1055 = vmatprep.subr.mxu0 0.0
        %1056 = vmatpush2.msra.mxu0 %v931
        %1057 = vmatprep.subr.mxu0 0.0
        %1058 = vmatpush2.msra.mxu0 %v930
        %1059 = vmatprep.subr.mxu0 0.0
        %1060 = vmatpush2.msra.mxu0 %v929
        %1061 = vmatprep.subr.mxu0 0.0
        %1062 = vmatpush2.msra.mxu0 %v928
        %1063 = vmatprep.subr.mxu0 0.0
        %1064 = vmatpush2.msra.mxu0 %v927
        %1065 = vmatprep.subr.mxu0 0.0
        %1066 = vmatpush2.msra.mxu0 %v926
        %1067 = vmatprep.subr.mxu0 0.0
        %1068 = vmatpush2.msra.mxu0 %v925
        %1069 = vmatprep.subr.mxu0 0.0
        %1070 = vmatpush2.msra.mxu0 %v924
        %1071 = vmatprep.subr.mxu0 0.0
        %1072 = vmatpush2.msra.mxu0 %v923
        %1073 = vmatprep.mubr.f32.mxu0 %v874
        %1074 = vmatmul.mubr.f32.gmra.mxu0 %v873
        %v1075 = vpop.f32.mrf.mxu0
        %v1076 = vadd.f32 %v1006, %v1075
        %v1077 = vpop.f32.mrf.mxu0
        %1078 = vdwg.mxu0
        %v1079 = vmul.f32 %v1076, 0.001953125
        %1081 = vset.pattern.permute.xlu0 0
        %1082 = vperm.xlu0 %1081, %v1079
        %v1083 = vpop.permute.xlu0 %1082
        %v1085 = vsub.f32 %v871, %v1083
        %v1086 = vsub.f32 %v872, %v1083
        %v1087 = vsub.f32 %v873, %v1083
        %v1088 = vsub.f32 %v874, %v1083
        %v1089 = vmul.f32 %v1085, %v1085
        %v1090 = vmul.f32 %v1086, %v1086
        %v1091 = vmul.f32 %v1087, %v1087
        %v1092 = vmul.f32 %v1088, %v1088
        %1093 = vmatprep.subr.mxu0 0.0
        %1094 = vmatpush1.msra.mxu0 %v890
        %1095 = vmatprep.subr.mxu0 0.0
        %1096 = vmatpush1.msra.mxu0 %v889
        %1097 = vmatprep.subr.mxu0 0.0
        %1098 = vmatpush1.msra.mxu0 %v888
        %1099 = vmatprep.subr.mxu0 0.0
        %1100 = vmatpush1.msra.mxu0 %v887
        %1101 = vmatprep.subr.mxu0 0.0
        %1102 = vmatpush1.msra.mxu0 %v886
        %1103 = vmatprep.subr.mxu0 0.0
        %1104 = vmatpush1.msra.mxu0 %v885
        %1105 = vmatprep.subr.mxu0 0.0
        %1106 = vmatpush1.msra.mxu0 %v884
        %1107 = vmatprep.subr.mxu0 0.0
        %1108 = vmatpush1.msra.mxu0 %v883
        %1109 = vmatprep.subr.mxu0 0.0
        %1110 = vmatpush1.msra.mxu0 %v882
        %1111 = vmatprep.subr.mxu0 0.0
        %1112 = vmatpush1.msra.mxu0 %v881
        %1113 = vmatprep.subr.mxu0 0.0
        %1114 = vmatpush1.msra.mxu0 %v880
        %1115 = vmatprep.subr.mxu0 0.0
        %1116 = vmatpush1.msra.mxu0 %v879
        %1117 = vmatprep.subr.mxu0 0.0
        %1118 = vmatpush1.msra.mxu0 %v878
        %1119 = vmatprep.subr.mxu0 0.0
        %1120 = vmatpush1.msra.mxu0 %v877
        %1121 = vmatprep.subr.mxu0 0.0
        %1122 = vmatpush1.msra.mxu0 %v876
        %1123 = vmatprep.subr.mxu0 0.0
        %1124 = vmatpush1.msra.mxu0 %v875
        %1125 = vmatprep.subr.mxu0 0.0
        %1126 = vmatpush2.msra.mxu0 %v906
        %1127 = vmatprep.subr.mxu0 0.0
        %1128 = vmatpush2.msra.mxu0 %v905
        %1129 = vmatprep.subr.mxu0 0.0
        %1130 = vmatpush2.msra.mxu0 %v904
        %1131 = vmatprep.subr.mxu0 0.0
        %1132 = vmatpush2.msra.mxu0 %v903
        %1133 = vmatprep.subr.mxu0 0.0
        %1134 = vmatpush2.msra.mxu0 %v902
        %1135 = vmatprep.subr.mxu0 0.0
        %1136 = vmatpush2.msra.mxu0 %v901
        %1137 = vmatprep.subr.mxu0 0.0
        %1138 = vmatpush2.msra.mxu0 %v900
        %1139 = vmatprep.subr.mxu0 0.0
        %1140 = vmatpush2.msra.mxu0 %v899
        %1141 = vmatprep.subr.mxu0 0.0
        %1142 = vmatpush2.msra.mxu0 %v898
        %1143 = vmatprep.subr.mxu0 0.0
        %1144 = vmatpush2.msra.mxu0 %v897
        %1145 = vmatprep.subr.mxu0 0.0
        %1146 = vmatpush2.msra.mxu0 %v896
        %1147 = vmatprep.subr.mxu0 0.0
        %1148 = vmatpush2.msra.mxu0 %v895
        %1149 = vmatprep.subr.mxu0 0.0
        %1150 = vmatpush2.msra.mxu0 %v894
        %1151 = vmatprep.subr.mxu0 0.0
        %1152 = vmatpush2.msra.mxu0 %v893
        %1153 = vmatprep.subr.mxu0 0.0
        %1154 = vmatpush2.msra.mxu0 %v892
        %1155 = vmatprep.subr.mxu0 0.0
        %1156 = vmatpush2.msra.mxu0 %v891
        %1157 = vmatprep.mubr.f32.mxu0 %v1090
        %1158 = vmatmul.mubr.f32.gmra.mxu0 %v1089
        %v1159 = vpop.f32.mrf.mxu0
        %v1160 = vadd.f32 0.0, %v1159
        %v1161 = vpop.f32.mrf.mxu0
        %1162 = vdwg.mxu0
        %1163 = vmatprep.subr.mxu0 0.0
        %1164 = vmatpush1.msra.mxu0 %v922
        %1165 = vmatprep.subr.mxu0 0.0
        %1166 = vmatpush1.msra.mxu0 %v921
        %1167 = vmatprep.subr.mxu0 0.0
        %1168 = vmatpush1.msra.mxu0 %v920
        %1169 = vmatprep.subr.mxu0 0.0
        %1170 = vmatpush1.msra.mxu0 %v919
        %1171 = vmatprep.subr.mxu0 0.0
        %1172 = vmatpush1.msra.mxu0 %v918
        %1173 = vmatprep.subr.mxu0 0.0
        %1174 = vmatpush1.msra.mxu0 %v917
        %1175 = vmatprep.subr.mxu0 0.0
        %1176 = vmatpush1.msra.mxu0 %v916
        %1177 = vmatprep.subr.mxu0 0.0
        %1178 = vmatpush1.msra.mxu0 %v915
        %1179 = vmatprep.subr.mxu0 0.0
        %1180 = vmatpush1.msra.mxu0 %v914
        %1181 = vmatprep.subr.mxu0 0.0
        %1182 = vmatpush1.msra.mxu0 %v913
        %1183 = vmatprep.subr.mxu0 0.0
        %1184 = vmatpush1.msra.mxu0 %v912
        %1185 = vmatprep.subr.mxu0 0.0
        %1186 = vmatpush1.msra.mxu0 %v911
        %1187 = vmatprep.subr.mxu0 0.0
        %1188 = vmatpush1.msra.mxu0 %v910
        %1189 = vmatprep.subr.mxu0 0.0
        %1190 = vmatpush1.msra.mxu0 %v909
        %1191 = vmatprep.subr.mxu0 0.0
        %1192 = vmatpush1.msra.mxu0 %v908
        %1193 = vmatprep.subr.mxu0 0.0
        %1194 = vmatpush1.msra.mxu0 %v907
        %1195 = vmatprep.subr.mxu0 0.0
        %1196 = vmatpush2.msra.mxu0 %v938
        %1197 = vmatprep.subr.mxu0 0.0
        %1198 = vmatpush2.msra.mxu0 %v937
        %1199 = vmatprep.subr.mxu0 0.0
        %1200 = vmatpush2.msra.mxu0 %v936
        %1201 = vmatprep.subr.mxu0 0.0
        %1202 = vmatpush2.msra.mxu0 %v935
        %1203 = vmatprep.subr.mxu0 0.0
        %1204 = vmatpush2.msra.mxu0 %v934
        %1205 = vmatprep.subr.mxu0 0.0
        %1206 = vmatpush2.msra.mxu0 %v933
        %1207 = vmatprep.subr.mxu0 0.0
        %1208 = vmatpush2.msra.mxu0 %v932
        %1209 = vmatprep.subr.mxu0 0.0
        %1210 = vmatpush2.msra.mxu0 %v931
        %1211 = vmatprep.subr.mxu0 0.0
        %1212 = vmatpush2.msra.mxu0 %v930
        %1213 = vmatprep.subr.mxu0 0.0
        %1214 = vmatpush2.msra.mxu0 %v929
        %1215 = vmatprep.subr.mxu0 0.0
        %1216 = vmatpush2.msra.mxu0 %v928
        %1217 = vmatprep.subr.mxu0 0.0
        %1218 = vmatpush2.msra.mxu0 %v927
        %1219 = vmatprep.subr.mxu0 0.0
        %1220 = vmatpush2.msra.mxu0 %v926
        %1221 = vmatprep.subr.mxu0 0.0
        %1222 = vmatpush2.msra.mxu0 %v925
        %1223 = vmatprep.subr.mxu0 0.0
        %1224 = vmatpush2.msra.mxu0 %v924
        %1225 = vmatprep.subr.mxu0 0.0
        %1226 = vmatpush2.msra.mxu0 %v923
        %1227 = vmatprep.mubr.f32.mxu0 %v1092
        %1228 = vmatmul.mubr.f32.gmra.mxu0 %v1091
        %v1229 = vpop.f32.mrf.mxu0
        %v1230 = vadd.f32 %v1160, %v1229
        %v1231 = vpop.f32.mrf.mxu0
        %1232 = vdwg.mxu0
        %v1233 = vmul.f32 %v1230, 0.001953125
        %v1234 = vld [vmem:[%s308] sm:$0xff]
        %v1235 = vadd.f32 %v1233, 1e-05
        %v1236 = vrsqrt.pop %v1235
        %v1237 = vmul.f32 %v1234, %v1236
        %1239 = vset.pattern.permute.xlu0 0
        %1240 = vperm.xlu0 %1239, %v1237
        %v1241 = vpop.permute.xlu0 %1240
        %v1243 = vmul.f32 %v1085, %v1241
        %v1244 = vmul.f32 %v1086, %v1241
        %v1245 = vmul.f32 %v1087, %v1241
        %v1246 = vmul.f32 %v1088, %v1241
        %v1247 = vld [vmem:[%s312] sm:$0xff]
        %1249 = vset.pattern.permute.xlu0 0
        %1250 = vperm.xlu0 %1249, %v1247
        %v1251 = vpop.permute.xlu0 %1250
        %v1253 = vadd.f32 %v1243, %v1251
        %v1254 = vadd.f32 %v1244, %v1251
        %v1255 = vadd.f32 %v1245, %v1251
        %v1256 = vadd.f32 %v1246, %v1251
        %1257 = vst [vmem:[#allocation2] sm:$0xff] %v1253
        %1258 = vst [vmem:[#allocation2 + $0x8] sm:$0xff] %v1254
        %1259 = vst [vmem:[#allocation2 + $0x10] sm:$0xff] %v1255
        %1260 = vst [vmem:[#allocation2 + $0x18] sm:$0xff] %v1256
        %p1261 = scmp.eq.s32.totalorder %s19, 3
        // Predicated region
        $region53: #{tpu_custom_call.1} parent=47 // pred_check
          %p1262 = pneg %p1261
        $region54: #{tpu_custom_call.1} parent=47 // pred_check_branch
          %1264 = sbr.rel (%p1262) target = $region56
        $region55: #{tpu_custom_call.1} parent=47 // pred_region
          %1265 = vst [vmem:[#allocation4] sm:$0xff] %v1253
          %1266 = vst [vmem:[#allocation4 + $0x8] sm:$0xff] %v1254
          %1267 = vst [vmem:[#allocation4 + $0x10] sm:$0xff] %v1255
          %1268 = vst [vmem:[#allocation4 + $0x18] sm:$0xff] %v1256
        $region56: #{tpu_custom_call.1} parent=47 // pred_fallthru
          _
        // Predicated region
        $region57: #{tpu_custom_call.1} parent=47 // pred_check
          %p1269 = pneg %p199
        $region58: #{tpu_custom_call.1} parent=47 // pred_check_branch
          %1271 = sbr.rel (%p1269) target = $region60
        $region59: #{tpu_custom_call.1} parent=47 // pred_region
          %s1273 = ssub.s32 512, 512
          %1274 = vsyncadd [#allocation5], %s1273
          %s1276 = sshll.u32 [#allocation4], 4
          %s1277 = int_to_ptr.vmem [resolvable:$true] %s1276
          %1279 = dma.vmem_to_hbm [thread:$0]  %s1277, 512, %s7, [#allocation5]
        $region60: #{tpu_custom_call.1} parent=47 // pred_fallthru
          _
        // Predicated region
        $region61: #{tpu_custom_call.1} parent=47 // pred_check
          %p1280 = pneg %p199
        $region62: #{tpu_custom_call.1} parent=47 // pred_check_branch
          %1282 = sbr.rel (%p1280) target = $region64
        $region63: #{tpu_custom_call.1} parent=47 // pred_region
          %1283 = dma.done [#allocation5], 512
        $region64: #{tpu_custom_call.1} parent=47 // pred_fallthru
          _
      $region48: #{tpu_custom_call.1} parent=5 // pred_fallthru
        _
      %p1284 = scmp.le.s32.totalorder 2, %s14
      // Predicated region
      $region65: #{tpu_custom_call.1} parent=5 // pred_check
        %p1285 = pneg %p1284
      $region66: #{tpu_custom_call.1} parent=5 // pred_check_branch
        %1287 = sbr.rel (%p1285) target = $region68
      $region67: #{tpu_custom_call.1} parent=5 // pred_region
        %s1288 = ssub.s32 %s14, 2
      $region68: #{tpu_custom_call.1} parent=5 // pred_fallthru
        _
    $region6: #{tpu_custom_call.1} parent=1 // loop_footer
      %s18 = sadd.s32 1, %s14
    $region7: #{tpu_custom_call.1} parent=1 // loop_footer_branch
      %13 = sbr.rel target = $region3
    $region8: #{tpu_custom_call.1} parent=1 // loop_exit
      _
    %1289 = vsyncpa [#allocation5], 1
    %s1290 = scalar_lea.sflag [#allocation5], 1
    %1291 = vsyncpa %s1290, 1

</llo_original>
